<compile_context>
chip_gen: v5e
topology: v5e:2x2
jax: 0.10.0
libtpu: 0.0.40
codegen_flags: <defaults>
</compile_context>

<pallas_src>
import functools

import jax
import jax.numpy as jnp
from jax.experimental import pallas as pl
from jax.experimental.pallas import tpu as pltpu

EPS = 1e-5        # PyTorch nn.LayerNorm default
NEG_INF = -1e10   # unavailable-action logit


def _round_up(x, m):
    return ((x + m - 1) // m) * m


def _layernorm(x, gamma, beta):
    # two-pass LayerNorm (f32): stable for large-mean inputs
    d = x.shape[-1]
    mean = jnp.sum(x, axis=-1, keepdims=True) * (1.0 / d)
    xc = x - mean
    var = jnp.sum(xc * xc, axis=-1, keepdims=True) * (1.0 / d)
    inv = jax.lax.rsqrt(var + EPS)
    return xc * inv * gamma + beta


def _bf16_dot(x, w_bf16):
    # MXU matmul: bf16 operands, f32 accumulation (2x throughput on v6e/v7x)
    return jnp.dot(x.astype(jnp.bfloat16), w_bf16,
                   preferred_element_type=jnp.float32)


def r_actor_kernel(
    in_ref,     # (tb, C) f32 slab: [obs | h0 | mask | gumbel | avail | pad]
    fln_ref,    # (2, obs_dim) f32: [fn_gamma; fn_beta]
    w1_ref,     # (obs_dim, H) bf16
    vecs_ref,   # (8, H) f32: [b1; g1; be1; b2; g2; be2; gr; br]
    wcat_ref,   # (H, Hp + 2*G3 + Ap) bf16: [w2 | wih | whh | w_act]
    gbias_ref,  # (2, G3) f32: [bih; bhh]   (gates contiguous, stride H)
    bact_ref,   # (1, A) f32
    out_ref,    # (tb, Cout) f32 slab: [h_new | logp | action | pad]
    *, obs_dim, H, A,
):
    Hp = _round_up(H, 128)        # w2 segment width inside wcat
    G3 = _round_up(3 * H, 128)    # packed GRU gate block width (gate stride H)
    tb = in_ref.shape[0]
    Cout = out_ref.shape[-1]

    xin = in_ref[...]
    obs = xin[:, 0:obs_dim]
    h0 = xin[:, obs_dim:obs_dim + H]
    msk = xin[:, obs_dim + H:obs_dim + H + 1]
    gum = xin[:, obs_dim + H + 1:obs_dim + H + 1 + A]
    avail = xin[:, obs_dim + H + 1 + A:obs_dim + H + 1 + 2 * A]

    # ---- MLPBase: feature LayerNorm over obs_dim ----
    x = _layernorm(obs, fln_ref[0:1, :], fln_ref[1:2, :])

    # ---- MLPLayer fc1: Linear -> ReLU -> LayerNorm ----
    x = _bf16_dot(x, w1_ref[...]) + vecs_ref[0:1, :]
    x = jnp.maximum(x, 0.0)
    x = _layernorm(x, vecs_ref[1:2, :], vecs_ref[2:3, :])

    # ---- MLPLayer fc2[0]: Linear -> ReLU -> LayerNorm (layer_N = 1) ----
    x = _bf16_dot(x, wcat_ref[:, 0:H]) + vecs_ref[3:4, :]
    x = jnp.maximum(x, 0.0)
    x = _layernorm(x, vecs_ref[4:5, :], vecs_ref[5:6, :])

    # ---- RNNLayer: masked hidden, single-step GRU (recurrent_N = 1) ----
    h = h0 * msk
    wih = wcat_ref[:, Hp:Hp + G3]
    whh = wcat_ref[:, Hp + G3:Hp + 2 * G3]
    gi = _bf16_dot(x, wih) + gbias_ref[0:1, :]
    gh = _bf16_dot(h, whh) + gbias_ref[1:2, :]
    i_r, i_z, i_n = gi[:, 0:H], gi[:, H:2 * H], gi[:, 2 * H:3 * H]
    h_r, h_z, h_n = gh[:, 0:H], gh[:, H:2 * H], gh[:, 2 * H:3 * H]
    r = jax.nn.sigmoid(i_r + h_r)
    z = jax.nn.sigmoid(i_z + h_z)
    n = jnp.tanh(i_n + r * h_n)
    h_new = (1.0 - z) * n + z * h

    # ---- post-GRU LayerNorm (actor features only; raw h_new is the state) ----
    feat = _layernorm(h_new, vecs_ref[6:7, :], vecs_ref[7:8, :])

    # ---- ACTLayer: Categorical(hidden -> action_dim) ----
    w_act = wcat_ref[:, Hp + 2 * G3:Hp + 2 * G3 + A]
    logits = _bf16_dot(feat, w_act) + bact_ref[...]
    logits = jnp.where(avail > 0.0, logits, NEG_INF)

    # Gumbel-max sampling (gum == 0 -> deterministic mode / argmax)
    y = logits + gum
    iota = jax.lax.broadcasted_iota(jnp.int32, y.shape, 1)
    ymax = jnp.max(y, axis=-1, keepdims=True)
    action = jnp.min(jnp.where(y == ymax, iota, A), axis=-1, keepdims=True)

    onehot = (iota == action).astype(jnp.float32)
    logit_sel = jnp.sum(logits * onehot, axis=-1, keepdims=True)
    m = jnp.max(logits, axis=-1, keepdims=True)
    lse = m + jnp.log(jnp.sum(jnp.exp(logits - m), axis=-1, keepdims=True))
    logp = logit_sel - lse

    # ---- single lane-dense result slab ----
    pad = jnp.zeros((tb, Cout - (H + 2)), jnp.float32)
    out_ref[...] = jnp.concatenate(
        [h_new, logp, action.astype(jnp.float32), pad], axis=-1)


@functools.partial(jax.jit, static_argnames=("block_b",))
def r_actor_forward(packed, obs, rnn_states, masks, gumbel,
                    available_actions=None, block_b=512):
    """Returns (actions (B,1) int32, action_log_probs (B,1), new_rnn_states (B,1,H))."""
    B = obs.shape[0]
    H = rnn_states.shape[-1]
    A = packed["b_act"].shape[-1]
    obs_dim = obs.shape[-1]

    obs = obs.astype(jnp.float32)
    h0 = rnn_states.reshape(B, -1, H)[:, 0, :].astype(jnp.float32)  # recurrent_N = 1
    masks = masks.astype(jnp.float32)
    gumbel = gumbel.astype(jnp.float32)
    if available_actions is None:
        avail = jnp.ones((B, A), jnp.float32)
    else:
        avail = available_actions.astype(jnp.float32)

    # ---- batch tile selection ----
    steps = max(1, -(-B // block_b))
    if B >= 16 and steps < 2:
        steps = 2                       # keep v7x's 2nd TensorCore busy
    tb = _round_up(-(-B // steps), 8)
    if tb >= 256:
        tb = (tb // 256) * 256          # fill the 256-wide MXU (v6e/v7x)
    tb = min(tb, max(8, block_b))
    Bp = _round_up(B, tb)

    # ---- one lane-dense activation slab per row ----
    W = obs_dim + H + 1 + 2 * A
    C = _round_up(W, 128)
    slab = jnp.concatenate([obs, h0, masks, gumbel, avail], axis=-1)
    slab = jnp.pad(slab, ((0, Bp - B), (0, C - W)))

    Cout = _round_up(H + 2, 128)

    kernel = functools.partial(r_actor_kernel, obs_dim=obs_dim, H=H, A=A)
    blk = lambda shape: pl.BlockSpec(shape, lambda i: (i, 0))
    res = lambda arr: pl.BlockSpec(arr.shape, lambda i: (0, 0))   # VMEM-resident

    out = pl.pallas_call(
        kernel,
        grid=(Bp // tb,),
        in_specs=[
            blk((tb, C)),
            res(packed["feat_ln"]), res(packed["w1"]), res(packed["vecs_h"]),
            res(packed["wcat"]), res(packed["gru_b"]), res(packed["b_act"]),
        ],
        out_specs=blk((tb, Cout)),
        out_shape=jax.ShapeDtypeStruct((Bp, Cout), jnp.float32),
        compiler_params=pltpu.CompilerParams(
            dimension_semantics=("parallel",),
            vmem_limit_bytes=48 * 1024 * 1024,
        ),
    )(slab, packed["feat_ln"], packed["w1"], packed["vecs_h"],
      packed["wcat"], packed["gru_b"], packed["b_act"])

    h_new = out[:B, 0:H]
    logp = out[:B, H:H + 1]
    actions = out[:B, H + 1:H + 2].astype(jnp.int32)
    return actions, logp, h_new.reshape(B, 1, H)
    # TODO(synk): multi-timestep rollout variant (grid=(B/tb, T) with T as the
    # trailing "arbitrary" axis and h carried in VMEM scratch) and
    # single-buffered (pl.Buffered(1)) weight residency for large H on v7x.


def make_params(key, obs_dim, hidden, act_dim):
    """Raw (PyTorch-layout, transposed) synthetic parameters, f32."""
    ks = jax.random.split(key, 6)
    s_in = 1.0 / (obs_dim ** 0.5)
    s_h = 1.0 / (hidden ** 0.5)
    return {
        "fn_g": jnp.ones((1, obs_dim), jnp.float32),
        "fn_b": jnp.zeros((1, obs_dim), jnp.float32),
        "w1": jax.random.normal(ks[0], (obs_dim, hidden), jnp.float32) * s_in,
        "b1": jnp.zeros((1, hidden), jnp.float32),
        "g1": jnp.ones((1, hidden), jnp.float32),
        "be1": jnp.zeros((1, hidden), jnp.float32),
        "w2": jax.random.normal(ks[1], (hidden, hidden), jnp.float32) * s_h,
        "b2": jnp.zeros((1, hidden), jnp.float32),
        "g2": jnp.ones((1, hidden), jnp.float32),
        "be2": jnp.zeros((1, hidden), jnp.float32),
        # GRU layer 0 (PyTorch gate order r, z, n), stored transposed
        "wih": jax.random.normal(ks[2], (hidden, 3 * hidden), jnp.float32) * s_h,
        "whh": jax.random.normal(ks[3], (hidden, 3 * hidden), jnp.float32) * s_h,
        "bih": jnp.zeros((1, 3 * hidden), jnp.float32),
        "bhh": jnp.zeros((1, 3 * hidden), jnp.float32),
        "gr": jnp.ones((1, hidden), jnp.float32),
        "br": jnp.zeros((1, hidden), jnp.float32),
        # ACTLayer Categorical head (hidden -> act_dim)
        "w_act": jax.random.normal(ks[4], (hidden, act_dim), jnp.float32) * s_h * 0.01,
        "b_act": jnp.zeros((1, act_dim), jnp.float32),
    }
    # TODO(synk): recurrent_N > 1 (stacked GRU), CNNBase, and continuous /
    # MultiDiscrete action heads not implemented (defaults covered).


def pack_params(raw, obs_dim, hidden, act_dim):
    """Pack raw params into a few lane-aligned operands; matmul weights bf16."""
    H, A = hidden, act_dim
    Hp = _round_up(H, 128)       # w2 segment width
    G3 = _round_up(3 * H, 128)   # GRU gates packed contiguously (stride H)
    Ap = _round_up(A, 128)       # w_act segment width

    def padw(w, width):
        return jnp.zeros((w.shape[0], width), jnp.float32).at[:, :w.shape[1]].set(w)

    wcat = jnp.concatenate(
        [padw(raw["w2"], Hp), padw(raw["wih"], G3),
         padw(raw["whh"], G3), padw(raw["w_act"], Ap)], axis=1)
    gru_b = jnp.concatenate([padw(raw["bih"], G3), padw(raw["bhh"], G3)], axis=0)

    return {
        "feat_ln": jnp.concatenate([raw["fn_g"], raw["fn_b"]], axis=0),
        "w1": raw["w1"].astype(jnp.bfloat16),
        "vecs_h": jnp.concatenate(
            [raw[k] for k in ("b1", "g1", "be1", "b2", "g2", "be2", "gr", "br")],
            axis=0),
        "wcat": wcat.astype(jnp.bfloat16),
        "gru_b": gru_b,
        "b_act": raw["b_act"],
    }


def ref_forward(raw, obs, h0, masks, gumbel, avail=None):
    """Pure-JAX reference mirroring the PyTorch R_Actor forward, using the same
    bf16-operand / f32-accumulate matmul precision as the kernel."""
    def mm(x, w):
        return jnp.dot(x.astype(jnp.bfloat16), w.astype(jnp.bfloat16),
                       preferred_element_type=jnp.float32)

    def ln(x, g, b):
        mu = x.mean(-1, keepdims=True)
        var = ((x - mu) ** 2).mean(-1, keepdims=True)
        return (x - mu) / jnp.sqrt(var + EPS) * g + b

    H = h0.shape[-1]
    x = ln(obs, raw["fn_g"], raw["fn_b"])
    x = ln(jnp.maximum(mm(x, raw["w1"]) + raw["b1"], 0.0), raw["g1"], raw["be1"])
    x = ln(jnp.maximum(mm(x, raw["w2"]) + raw["b2"], 0.0), raw["g2"], raw["be2"])
    h = h0 * masks
    gi = mm(x, raw["wih"]) + raw["bih"]
    gh = mm(h, raw["whh"]) + raw["bhh"]
    i_r, i_z, i_n = gi[:, :H], gi[:, H:2 * H], gi[:, 2 * H:]
    h_r, h_z, h_n = gh[:, :H], gh[:, H:2 * H], gh[:, 2 * H:]
    r = jax.nn.sigmoid(i_r + h_r)
    z = jax.nn.sigmoid(i_z + h_z)
    n = jnp.tanh(i_n + r * h_n)
    h_new = (1.0 - z) * n + z * h
    feat = ln(h_new, raw["gr"], raw["br"])
    logits = mm(feat, raw["w_act"]) + raw["b_act"]
    if avail is not None:
        logits = jnp.where(avail > 0, logits, NEG_INF)
    act = jnp.argmax(logits + gumbel, axis=-1).reshape(-1, 1).astype(jnp.int32)
    lp = jnp.take_along_axis(jax.nn.log_softmax(logits, axis=-1), act, axis=-1)
    return act, lp, h_new


if __name__ == "__main__":
    # B=48 exercises the >=2-grid-step path (tb=24, grid=(2,)).
    B, OBS_DIM, HIDDEN, ACT_DIM, REC_N = 48, 24, 32, 5, 1

    key = jax.random.PRNGKey(0)
    kp, ko, kh, km, kg = jax.random.split(key, 5)

    raw = make_params(kp, OBS_DIM, HIDDEN, ACT_DIM)
    packed = pack_params(raw, OBS_DIM, HIDDEN, ACT_DIM)

    obs = jax.random.normal(ko, (B, OBS_DIM), jnp.float32)
    rnn_states = jax.random.normal(kh, (B, REC_N, HIDDEN), jnp.float32)
    masks = (jax.random.uniform(km, (B, 1)) > 0.3).astype(jnp.float32)
    gumbel = jax.random.gumbel(kg, (B, ACT_DIM), jnp.float32)  # sampling noise

    actions, logp, new_states = r_actor_forward(packed, obs, rnn_states,
                                                masks, gumbel)
    jax.block_until_ready((actions, logp, new_states))

    assert actions.shape == (B, 1) and actions.dtype == jnp.int32
    assert logp.shape == (B, 1)
    assert new_states.shape == (B, REC_N, HIDDEN)

    # correctness check vs pure-JAX reference (same bf16 matmul precision)
    a_ref, lp_ref, h_ref = ref_forward(raw, obs,
                                       rnn_states.reshape(B, HIDDEN),
                                       masks, gumbel)
    assert bool(jnp.all(actions == a_ref))
    assert bool(jnp.allclose(logp, lp_ref, atol=2e-3, rtol=2e-3))
    assert bool(jnp.allclose(new_states.reshape(B, HIDDEN), h_ref,
                             atol=2e-3, rtol=2e-3))

    print("KERNEL_OK")
</pallas_src>

<mosaic_0001>
module attributes {stable_mosaic.version = 11 : i64} {
  func.func @r_actor_kernel(%arg0: i32, %arg1: memref<24x128xf32, #tpu.memory_space<vmem>>, %arg2: memref<2x24xf32, #tpu.memory_space<vmem>>, %arg3: memref<24x32xbf16, #tpu.memory_space<vmem>>, %arg4: memref<8x32xf32, #tpu.memory_space<vmem>>, %arg5: memref<32x512xbf16, #tpu.memory_space<vmem>>, %arg6: memref<2x128xf32, #tpu.memory_space<vmem>>, %arg7: memref<1x5xf32, #tpu.memory_space<vmem>>, %arg8: memref<24x128xf32, #tpu.memory_space<vmem>>) attributes {dimension_semantics = [#tpu.dimension_semantics<parallel>], iteration_bounds = array<i64: 2>, scalar_prefetch = 0 : i64, scratch_operands = 0 : i64, tpu.core_type = #tpu.core_type<tc>, window_params = [{transform_indices = @transform_0, window_bounds = array<i64: 24, 128>}, {pipeline_mode = #tpu.pipeline_mode<synchronous>, transform_indices = @transform_1, window_bounds = array<i64: 2, 24>}, {pipeline_mode = #tpu.pipeline_mode<synchronous>, transform_indices = @transform_2, window_bounds = array<i64: 24, 32>}, {pipeline_mode = #tpu.pipeline_mode<synchronous>, transform_indices = @transform_3, window_bounds = array<i64: 8, 32>}, {pipeline_mode = #tpu.pipeline_mode<synchronous>, transform_indices = @transform_4, window_bounds = array<i64: 32, 512>}, {pipeline_mode = #tpu.pipeline_mode<synchronous>, transform_indices = @transform_5, window_bounds = array<i64: 2, 128>}, {pipeline_mode = #tpu.pipeline_mode<synchronous>, transform_indices = @transform_6, window_bounds = array<i64: 1, 5>}, {transform_indices = @transform_7, window_bounds = array<i64: 24, 128>}]} {
    %c0 = arith.constant 0 : index
    %c0_0 = arith.constant 0 : index
    %0 = vector.load %arg1[%c0, %c0_0] : memref<24x128xf32, #tpu.memory_space<vmem>>, vector<24x128xf32>
    %1 = vector.extract_strided_slice %0 {offsets = [0, 0], sizes = [24, 24], strides = [1, 1]} : vector<24x128xf32> to vector<24x24xf32>
    %2 = vector.extract_strided_slice %0 {offsets = [0, 24], sizes = [24, 32], strides = [1, 1]} : vector<24x128xf32> to vector<24x32xf32>
    %3 = vector.extract_strided_slice %0 {offsets = [0, 56], sizes = [24, 1], strides = [1, 1]} : vector<24x128xf32> to vector<24x1xf32>
    %4 = vector.extract_strided_slice %0 {offsets = [0, 57], sizes = [24, 5], strides = [1, 1]} : vector<24x128xf32> to vector<24x5xf32>
    %5 = vector.extract_strided_slice %0 {offsets = [0, 62], sizes = [24, 5], strides = [1, 1]} : vector<24x128xf32> to vector<24x5xf32>
    %c0_1 = arith.constant 0 : index
    %c0_2 = arith.constant 0 : index
    %6 = vector.load %arg2[%c0_1, %c0_2] : memref<2x24xf32, #tpu.memory_space<vmem>>, vector<1x24xf32>
    %c1 = arith.constant 1 : index
    %c0_3 = arith.constant 0 : index
    %7 = vector.load %arg2[%c1, %c0_3] : memref<2x24xf32, #tpu.memory_space<vmem>>, vector<1x24xf32>
    %cst = arith.constant dense<0.000000e+00> : vector<24xf32>
    %8 = vector.multi_reduction <add>, %1, %cst [1] : vector<24x24xf32> to vector<24xf32>
    %9 = vector.shape_cast %8 : vector<24xf32> to vector<24x1xf32>
    %cst_4 = arith.constant 0.0416666679 : f32
    %10 = vector.broadcast %cst_4 : f32 to vector<24x1xf32>
    %11 = arith.mulf %9, %10 : vector<24x1xf32>
    %12 = vector.broadcast %11 : vector<24x1xf32> to vector<24x24xf32>
    %13 = arith.subf %1, %12 : vector<24x24xf32>
    %14 = arith.mulf %13, %13 : vector<24x24xf32>
    %cst_5 = arith.constant dense<0.000000e+00> : vector<24xf32>
    %15 = vector.multi_reduction <add>, %14, %cst_5 [1] : vector<24x24xf32> to vector<24xf32>
    %16 = vector.shape_cast %15 : vector<24xf32> to vector<24x1xf32>
    %cst_6 = arith.constant 0.0416666679 : f32
    %17 = vector.broadcast %cst_6 : f32 to vector<24x1xf32>
    %18 = arith.mulf %16, %17 : vector<24x1xf32>
    %cst_7 = arith.constant 9.99999974E-6 : f32
    %19 = vector.broadcast %cst_7 : f32 to vector<24x1xf32>
    %20 = arith.addf %18, %19 : vector<24x1xf32>
    %21 = math.rsqrt %20 : vector<24x1xf32>
    %22 = vector.broadcast %21 : vector<24x1xf32> to vector<24x24xf32>
    %23 = arith.mulf %13, %22 : vector<24x24xf32>
    %24 = vector.broadcast %6 : vector<1x24xf32> to vector<24x24xf32>
    %25 = arith.mulf %23, %24 : vector<24x24xf32>
    %26 = vector.broadcast %7 : vector<1x24xf32> to vector<24x24xf32>
    %27 = arith.addf %25, %26 : vector<24x24xf32>
    %c0_8 = arith.constant 0 : index
    %c0_9 = arith.constant 0 : index
    %28 = vector.load %arg3[%c0_8, %c0_9] : memref<24x32xbf16, #tpu.memory_space<vmem>>, vector<24x32xbf16>
    %29 = arith.truncf %27 : vector<24x24xf32> to vector<24x24xbf16>
    %cst_10 = arith.constant dense<0.000000e+00> : vector<24x32xf32>
    %30 = tpu.matmul %29, %28, %cst_10 {dimension_numbers = #tpu.dot_dimension_numbers<[1], [0], [0], [1], [0, 0, 1, 1], [], []>} : vector<24x24xbf16>, vector<24x32xbf16>, vector<24x32xf32> -> vector<24x32xf32>
    %c0_11 = arith.constant 0 : index
    %c0_12 = arith.constant 0 : index
    %31 = vector.load %arg4[%c0_11, %c0_12] : memref<8x32xf32, #tpu.memory_space<vmem>>, vector<1x32xf32>
    %32 = vector.broadcast %31 : vector<1x32xf32> to vector<24x32xf32>
    %33 = arith.addf %30, %32 : vector<24x32xf32>
    %cst_13 = arith.constant 0.000000e+00 : f32
    %34 = vector.broadcast %cst_13 : f32 to vector<24x32xf32>
    %35 = arith.maximumf %33, %34 : vector<24x32xf32>
    %c1_14 = arith.constant 1 : index
    %c0_15 = arith.constant 0 : index
    %36 = vector.load %arg4[%c1_14, %c0_15] : memref<8x32xf32, #tpu.memory_space<vmem>>, vector<1x32xf32>
    %c2 = arith.constant 2 : index
    %c0_16 = arith.constant 0 : index
    %37 = vector.load %arg4[%c2, %c0_16] : memref<8x32xf32, #tpu.memory_space<vmem>>, vector<1x32xf32>
    %cst_17 = arith.constant dense<0.000000e+00> : vector<24xf32>
    %38 = vector.multi_reduction <add>, %35, %cst_17 [1] : vector<24x32xf32> to vector<24xf32>
    %39 = vector.shape_cast %38 : vector<24xf32> to vector<24x1xf32>
    %cst_18 = arith.constant 3.125000e-02 : f32
    %40 = vector.broadcast %cst_18 : f32 to vector<24x1xf32>
    %41 = arith.mulf %39, %40 : vector<24x1xf32>
    %42 = vector.broadcast %41 : vector<24x1xf32> to vector<24x32xf32>
    %43 = arith.subf %35, %42 : vector<24x32xf32>
    %44 = arith.mulf %43, %43 : vector<24x32xf32>
    %cst_19 = arith.constant dense<0.000000e+00> : vector<24xf32>
    %45 = vector.multi_reduction <add>, %44, %cst_19 [1] : vector<24x32xf32> to vector<24xf32>
    %46 = vector.shape_cast %45 : vector<24xf32> to vector<24x1xf32>
    %cst_20 = arith.constant 3.125000e-02 : f32
    %47 = vector.broadcast %cst_20 : f32 to vector<24x1xf32>
    %48 = arith.mulf %46, %47 : vector<24x1xf32>
    %cst_21 = arith.constant 9.99999974E-6 : f32
    %49 = vector.broadcast %cst_21 : f32 to vector<24x1xf32>
    %50 = arith.addf %48, %49 : vector<24x1xf32>
    %51 = math.rsqrt %50 : vector<24x1xf32>
    %52 = vector.broadcast %51 : vector<24x1xf32> to vector<24x32xf32>
    %53 = arith.mulf %43, %52 : vector<24x32xf32>
    %54 = vector.broadcast %36 : vector<1x32xf32> to vector<24x32xf32>
    %55 = arith.mulf %53, %54 : vector<24x32xf32>
    %56 = vector.broadcast %37 : vector<1x32xf32> to vector<24x32xf32>
    %57 = arith.addf %55, %56 : vector<24x32xf32>
    %c0_22 = arith.constant 0 : index
    %c0_23 = arith.constant 0 : index
    %58 = vector.load %arg5[%c0_22, %c0_23] : memref<32x512xbf16, #tpu.memory_space<vmem>>, vector<32x32xbf16>
    %59 = arith.truncf %57 : vector<24x32xf32> to vector<24x32xbf16>
    %cst_24 = arith.constant dense<0.000000e+00> : vector<24x32xf32>
    %60 = tpu.matmul %59, %58, %cst_24 {dimension_numbers = #tpu.dot_dimension_numbers<[1], [0], [0], [1], [0, 0, 1, 1], [], []>} : vector<24x32xbf16>, vector<32x32xbf16>, vector<24x32xf32> -> vector<24x32xf32>
    %c3 = arith.constant 3 : index
    %c0_25 = arith.constant 0 : index
    %61 = vector.load %arg4[%c3, %c0_25] : memref<8x32xf32, #tpu.memory_space<vmem>>, vector<1x32xf32>
    %62 = vector.broadcast %61 : vector<1x32xf32> to vector<24x32xf32>
    %63 = arith.addf %60, %62 : vector<24x32xf32>
    %cst_26 = arith.constant 0.000000e+00 : f32
    %64 = vector.broadcast %cst_26 : f32 to vector<24x32xf32>
    %65 = arith.maximumf %63, %64 : vector<24x32xf32>
    %c4 = arith.constant 4 : index
    %c0_27 = arith.constant 0 : index
    %66 = vector.load %arg4[%c4, %c0_27] : memref<8x32xf32, #tpu.memory_space<vmem>>, vector<1x32xf32>
    %c5 = arith.constant 5 : index
    %c0_28 = arith.constant 0 : index
    %67 = vector.load %arg4[%c5, %c0_28] : memref<8x32xf32, #tpu.memory_space<vmem>>, vector<1x32xf32>
    %cst_29 = arith.constant dense<0.000000e+00> : vector<24xf32>
    %68 = vector.multi_reduction <add>, %65, %cst_29 [1] : vector<24x32xf32> to vector<24xf32>
    %69 = vector.shape_cast %68 : vector<24xf32> to vector<24x1xf32>
    %cst_30 = arith.constant 3.125000e-02 : f32
    %70 = vector.broadcast %cst_30 : f32 to vector<24x1xf32>
    %71 = arith.mulf %69, %70 : vector<24x1xf32>
    %72 = vector.broadcast %71 : vector<24x1xf32> to vector<24x32xf32>
    %73 = arith.subf %65, %72 : vector<24x32xf32>
    %74 = arith.mulf %73, %73 : vector<24x32xf32>
    %cst_31 = arith.constant dense<0.000000e+00> : vector<24xf32>
    %75 = vector.multi_reduction <add>, %74, %cst_31 [1] : vector<24x32xf32> to vector<24xf32>
    %76 = vector.shape_cast %75 : vector<24xf32> to vector<24x1xf32>
    %cst_32 = arith.constant 3.125000e-02 : f32
    %77 = vector.broadcast %cst_32 : f32 to vector<24x1xf32>
    %78 = arith.mulf %76, %77 : vector<24x1xf32>
    %cst_33 = arith.constant 9.99999974E-6 : f32
    %79 = vector.broadcast %cst_33 : f32 to vector<24x1xf32>
    %80 = arith.addf %78, %79 : vector<24x1xf32>
    %81 = math.rsqrt %80 : vector<24x1xf32>
    %82 = vector.broadcast %81 : vector<24x1xf32> to vector<24x32xf32>
    %83 = arith.mulf %73, %82 : vector<24x32xf32>
    %84 = vector.broadcast %66 : vector<1x32xf32> to vector<24x32xf32>
    %85 = arith.mulf %83, %84 : vector<24x32xf32>
    %86 = vector.broadcast %67 : vector<1x32xf32> to vector<24x32xf32>
    %87 = arith.addf %85, %86 : vector<24x32xf32>
    %88 = vector.broadcast %3 : vector<24x1xf32> to vector<24x32xf32>
    %89 = arith.mulf %2, %88 : vector<24x32xf32>
    %c0_34 = arith.constant 0 : index
    %c128 = arith.constant 128 : index
    %90 = vector.load %arg5[%c0_34, %c128] : memref<32x512xbf16, #tpu.memory_space<vmem>>, vector<32x128xbf16>
    %c0_35 = arith.constant 0 : index
    %c256 = arith.constant 256 : index
    %91 = vector.load %arg5[%c0_35, %c256] : memref<32x512xbf16, #tpu.memory_space<vmem>>, vector<32x128xbf16>
    %92 = arith.truncf %87 : vector<24x32xf32> to vector<24x32xbf16>
    %cst_36 = arith.constant dense<0.000000e+00> : vector<24x128xf32>
    %93 = tpu.matmul %92, %90, %cst_36 {dimension_numbers = #tpu.dot_dimension_numbers<[1], [0], [0], [1], [0, 0, 1, 1], [], []>} : vector<24x32xbf16>, vector<32x128xbf16>, vector<24x128xf32> -> vector<24x128xf32>
    %c0_37 = arith.constant 0 : index
    %c0_38 = arith.constant 0 : index
    %94 = vector.load %arg6[%c0_37, %c0_38] : memref<2x128xf32, #tpu.memory_space<vmem>>, vector<1x128xf32>
    %95 = vector.broadcast %94 : vector<1x128xf32> to vector<24x128xf32>
    %96 = arith.addf %93, %95 : vector<24x128xf32>
    %97 = arith.truncf %89 : vector<24x32xf32> to vector<24x32xbf16>
    %cst_39 = arith.constant dense<0.000000e+00> : vector<24x128xf32>
    %98 = tpu.matmul %97, %91, %cst_39 {dimension_numbers = #tpu.dot_dimension_numbers<[1], [0], [0], [1], [0, 0, 1, 1], [], []>} : vector<24x32xbf16>, vector<32x128xbf16>, vector<24x128xf32> -> vector<24x128xf32>
    %c1_40 = arith.constant 1 : index
    %c0_41 = arith.constant 0 : index
    %99 = vector.load %arg6[%c1_40, %c0_41] : memref<2x128xf32, #tpu.memory_space<vmem>>, vector<1x128xf32>
    %100 = vector.broadcast %99 : vector<1x128xf32> to vector<24x128xf32>
    %101 = arith.addf %98, %100 : vector<24x128xf32>
    %102 = vector.extract_strided_slice %96 {offsets = [0, 0], sizes = [24, 32], strides = [1, 1]} : vector<24x128xf32> to vector<24x32xf32>
    %103 = vector.extract_strided_slice %96 {offsets = [0, 32], sizes = [24, 32], strides = [1, 1]} : vector<24x128xf32> to vector<24x32xf32>
    %104 = vector.extract_strided_slice %96 {offsets = [0, 64], sizes = [24, 32], strides = [1, 1]} : vector<24x128xf32> to vector<24x32xf32>
    %105 = vector.extract_strided_slice %101 {offsets = [0, 0], sizes = [24, 32], strides = [1, 1]} : vector<24x128xf32> to vector<24x32xf32>
    %106 = vector.extract_strided_slice %101 {offsets = [0, 32], sizes = [24, 32], strides = [1, 1]} : vector<24x128xf32> to vector<24x32xf32>
    %107 = vector.extract_strided_slice %101 {offsets = [0, 64], sizes = [24, 32], strides = [1, 1]} : vector<24x128xf32> to vector<24x32xf32>
    %108 = arith.addf %102, %105 : vector<24x32xf32>
    %109 = arith.negf %108 : vector<24x32xf32>
    %110 = math.exp %109 : vector<24x32xf32>
    %cst_42 = arith.constant 1.000000e+00 : f32
    %111 = vector.broadcast %cst_42 : f32 to vector<24x32xf32>
    %112 = arith.addf %111, %110 : vector<24x32xf32>
    %113 = arith.divf %111, %112 : vector<24x32xf32>
    %114 = arith.addf %103, %106 : vector<24x32xf32>
    %115 = arith.negf %114 : vector<24x32xf32>
    %116 = math.exp %115 : vector<24x32xf32>
    %cst_43 = arith.constant 1.000000e+00 : f32
    %117 = vector.broadcast %cst_43 : f32 to vector<24x32xf32>
    %118 = arith.addf %117, %116 : vector<24x32xf32>
    %119 = arith.divf %117, %118 : vector<24x32xf32>
    %120 = arith.mulf %113, %107 : vector<24x32xf32>
    %121 = arith.addf %104, %120 : vector<24x32xf32>
    %122 = math.tanh %121 : vector<24x32xf32>
    %cst_44 = arith.constant 1.000000e+00 : f32
    %123 = vector.broadcast %cst_44 : f32 to vector<24x32xf32>
    %124 = arith.subf %123, %119 : vector<24x32xf32>
    %125 = arith.mulf %124, %122 : vector<24x32xf32>
    %126 = arith.mulf %119, %89 : vector<24x32xf32>
    %127 = arith.addf %125, %126 : vector<24x32xf32>
    %c6 = arith.constant 6 : index
    %c0_45 = arith.constant 0 : index
    %128 = vector.load %arg4[%c6, %c0_45] : memref<8x32xf32, #tpu.memory_space<vmem>>, vector<1x32xf32>
    %c7 = arith.constant 7 : index
    %c0_46 = arith.constant 0 : index
    %129 = vector.load %arg4[%c7, %c0_46] : memref<8x32xf32, #tpu.memory_space<vmem>>, vector<1x32xf32>
    %cst_47 = arith.constant dense<0.000000e+00> : vector<24xf32>
    %130 = vector.multi_reduction <add>, %127, %cst_47 [1] : vector<24x32xf32> to vector<24xf32>
    %131 = vector.shape_cast %130 : vector<24xf32> to vector<24x1xf32>
    %cst_48 = arith.constant 3.125000e-02 : f32
    %132 = vector.broadcast %cst_48 : f32 to vector<24x1xf32>
    %133 = arith.mulf %131, %132 : vector<24x1xf32>
    %134 = vector.broadcast %133 : vector<24x1xf32> to vector<24x32xf32>
    %135 = arith.subf %127, %134 : vector<24x32xf32>
    %136 = arith.mulf %135, %135 : vector<24x32xf32>
    %cst_49 = arith.constant dense<0.000000e+00> : vector<24xf32>
    %137 = vector.multi_reduction <add>, %136, %cst_49 [1] : vector<24x32xf32> to vector<24xf32>
    %138 = vector.shape_cast %137 : vector<24xf32> to vector<24x1xf32>
    %cst_50 = arith.constant 3.125000e-02 : f32
    %139 = vector.broadcast %cst_50 : f32 to vector<24x1xf32>
    %140 = arith.mulf %138, %139 : vector<24x1xf32>
    %cst_51 = arith.constant 9.99999974E-6 : f32
    %141 = vector.broadcast %cst_51 : f32 to vector<24x1xf32>
    %142 = arith.addf %140, %141 : vector<24x1xf32>
    %143 = math.rsqrt %142 : vector<24x1xf32>
    %144 = vector.broadcast %143 : vector<24x1xf32> to vector<24x32xf32>
    %145 = arith.mulf %135, %144 : vector<24x32xf32>
    %146 = vector.broadcast %128 : vector<1x32xf32> to vector<24x32xf32>
    %147 = arith.mulf %145, %146 : vector<24x32xf32>
    %148 = vector.broadcast %129 : vector<1x32xf32> to vector<24x32xf32>
    %149 = arith.addf %147, %148 : vector<24x32xf32>
    %c0_52 = arith.constant 0 : index
    %c384 = arith.constant 384 : index
    %150 = vector.load %arg5[%c0_52, %c384] : memref<32x512xbf16, #tpu.memory_space<vmem>>, vector<32x5xbf16>
    %151 = arith.truncf %149 : vector<24x32xf32> to vector<24x32xbf16>
    %cst_53 = arith.constant dense<0.000000e+00> : vector<24x5xf32>
    %152 = tpu.matmul %151, %150, %cst_53 {dimension_numbers = #tpu.dot_dimension_numbers<[1], [0], [0], [1], [0, 0, 1, 1], [], []>} : vector<24x32xbf16>, vector<32x5xbf16>, vector<24x5xf32> -> vector<24x5xf32>
    %c0_54 = arith.constant 0 : index
    %c0_55 = arith.constant 0 : index
    %153 = vector.load %arg7[%c0_54, %c0_55] : memref<1x5xf32, #tpu.memory_space<vmem>>, vector<1x5xf32>
    %154 = vector.broadcast %153 : vector<1x5xf32> to vector<24x5xf32>
    %155 = arith.addf %152, %154 : vector<24x5xf32>
    %cst_56 = arith.constant 0.000000e+00 : f32
    %156 = vector.broadcast %cst_56 : f32 to vector<24x5xf32>
    %157 = arith.cmpf ogt, %5, %156 : vector<24x5xf32>
    %cst_57 = arith.constant -1.000000e+10 : f32
    %158 = vector.broadcast %cst_57 : f32 to vector<24x5xf32>
    %159 = arith.select %157, %155, %158 : vector<24x5xi1>, vector<24x5xf32>
    %160 = arith.addf %159, %4 : vector<24x5xf32>
    %161 = tpu.iota {dimensions = array<i32: 1>} : vector<24x5xi32>
    %cst_58 = arith.constant dense<0xFF800000> : vector<24xf32>
    %162 = vector.multi_reduction <maximumf>, %160, %cst_58 [1] : vector<24x5xf32> to vector<24xf32>
    %163 = vector.shape_cast %162 : vector<24xf32> to vector<24x1xf32>
    %164 = vector.broadcast %163 : vector<24x1xf32> to vector<24x5xf32>
    %165 = arith.cmpf oeq, %160, %164 : vector<24x5xf32>
    %c5_i32 = arith.constant 5 : i32
    %166 = vector.broadcast %c5_i32 : i32 to vector<24x5xi32>
    %167 = arith.select %165, %161, %166 : vector<24x5xi1>, vector<24x5xi32>
    %cst_59 = arith.constant dense<2147483647> : vector<24xi32>
    %168 = vector.multi_reduction <minsi>, %167, %cst_59 [1] : vector<24x5xi32> to vector<24xi32>
    %169 = vector.shape_cast %168 : vector<24xi32> to vector<24x1xi32>
    %170 = vector.broadcast %169 : vector<24x1xi32> to vector<24x5xi32>
    %171 = arith.cmpi eq, %161, %170 : vector<24x5xi32>
    %172 = arith.extui %171 : vector<24x5xi1> to vector<24x5xi32>
    %173 = arith.sitofp %172 : vector<24x5xi32> to vector<24x5xf32>
    %174 = arith.mulf %159, %173 : vector<24x5xf32>
    %cst_60 = arith.constant dense<0.000000e+00> : vector<24xf32>
    %175 = vector.multi_reduction <add>, %174, %cst_60 [1] : vector<24x5xf32> to vector<24xf32>
    %176 = vector.shape_cast %175 : vector<24xf32> to vector<24x1xf32>
    %cst_61 = arith.constant dense<0xFF800000> : vector<24xf32>
    %177 = vector.multi_reduction <maximumf>, %159, %cst_61 [1] : vector<24x5xf32> to vector<24xf32>
    %178 = vector.shape_cast %177 : vector<24xf32> to vector<24x1xf32>
    %179 = vector.broadcast %178 : vector<24x1xf32> to vector<24x5xf32>
    %180 = arith.subf %159, %179 : vector<24x5xf32>
    %181 = math.exp %180 : vector<24x5xf32>
    %cst_62 = arith.constant dense<0.000000e+00> : vector<24xf32>
    %182 = vector.multi_reduction <add>, %181, %cst_62 [1] : vector<24x5xf32> to vector<24xf32>
    %183 = vector.shape_cast %182 : vector<24xf32> to vector<24x1xf32>
    %184 = math.log %183 : vector<24x1xf32>
    %185 = arith.addf %178, %184 : vector<24x1xf32>
    %186 = arith.subf %176, %185 : vector<24x1xf32>
    %cst_63 = arith.constant 0.000000e+00 : f32
    %187 = vector.broadcast %cst_63 : f32 to vector<24x94xf32>
    %188 = arith.sitofp %169 : vector<24x1xi32> to vector<24x1xf32>
    %189 = tpu.concatenate %127, %186, %188, %187 in 1 : vector<24x32xf32>, vector<24x1xf32>, vector<24x1xf32>, vector<24x94xf32> -> vector<24x128xf32>
    %c0_64 = arith.constant 0 : index
    %c0_65 = arith.constant 0 : index
    %190 = vector.load %arg8[%c0_64, %c0_65] : memref<24x128xf32, #tpu.memory_space<vmem>>, vector<24x128xf32>
    tpu.vector_store %arg8[%c0_64, %c0_65], %189 {strides = array<i32>} : memref<24x128xf32, #tpu.memory_space<vmem>>, vector<24x128xf32>,
    return
  }
  func.func @transform_0(%arg0: i32) -> (i32, i32) {
    %c0_i32 = arith.constant 0 : i32
    %c0_i32_0 = arith.constant 0 : i32
    return %arg0, %c0_i32 : i32, i32
  }
  func.func @transform_1(%arg0: i32) -> (i32, i32) {
    %c0_i32 = arith.constant 0 : i32
    %c0_i32_0 = arith.constant 0 : i32
    %c0_i32_1 = arith.constant 0 : i32
    return %c0_i32, %c0_i32_0 : i32, i32
  }
  func.func @transform_2(%arg0: i32) -> (i32, i32) {
    %c0_i32 = arith.constant 0 : i32
    %c0_i32_0 = arith.constant 0 : i32
    %c0_i32_1 = arith.constant 0 : i32
    return %c0_i32, %c0_i32_0 : i32, i32
  }
  func.func @transform_3(%arg0: i32) -> (i32, i32) {
    %c0_i32 = arith.constant 0 : i32
    %c0_i32_0 = arith.constant 0 : i32
    %c0_i32_1 = arith.constant 0 : i32
    return %c0_i32, %c0_i32_0 : i32, i32
  }
  func.func @transform_4(%arg0: i32) -> (i32, i32) {
    %c0_i32 = arith.constant 0 : i32
    %c0_i32_0 = arith.constant 0 : i32
    %c0_i32_1 = arith.constant 0 : i32
    return %c0_i32, %c0_i32_0 : i32, i32
  }
  func.func @transform_5(%arg0: i32) -> (i32, i32) {
    %c0_i32 = arith.constant 0 : i32
    %c0_i32_0 = arith.constant 0 : i32
    %c0_i32_1 = arith.constant 0 : i32
    return %c0_i32, %c0_i32_0 : i32, i32
  }
  func.func @transform_6(%arg0: i32) -> (i32, i32) {
    %c0_i32 = arith.constant 0 : i32
    %c0_i32_0 = arith.constant 0 : i32
    %c0_i32_1 = arith.constant 0 : i32
    return %c0_i32, %c0_i32_0 : i32, i32
  }
  func.func @transform_7(%arg0: i32) -> (i32, i32) {
    %c0_i32 = arith.constant 0 : i32
    %c0_i32_0 = arith.constant 0 : i32
    return %arg0, %c0_i32 : i32, i32
  }
}

</mosaic_0001>

<llo_original>
// kernel: r_actor_forward.1
$region0: #{r_actor_forward.1}
  #allocation0 [shape = 'u32[]', space=smem, size = 0x4, offset = 0x4, fixed_abs, tag = 'smem constant byte address 0x4 - core index']
  #allocation1 [shape = 'u32[72,128]{1,0:T(1,128)}', space=vmem, size = 0x9000, scoped, tag = 'internal scratch']
  %s0 = inlined_call_operand.vmem [shape: f32[48,128], index: 0, kind: input, shape index: {}]
  %s1 = inlined_call_operand.vmem [shape: f32[2,24], index: 1, kind: input, shape index: {}]
  %s2 = inlined_call_operand.vmem [shape: bf16[24,32], index: 2, kind: input, shape index: {}]
  %s3 = inlined_call_operand.vmem [shape: f32[8,32], index: 3, kind: input, shape index: {}]
  %s4 = inlined_call_operand.vmem [shape: bf16[32,512], index: 4, kind: input, shape index: {}]
  %s5 = inlined_call_operand.vmem [shape: f32[2,128], index: 5, kind: input, shape index: {}]
  %s6 = inlined_call_operand.vmem [shape: f32[1,5], index: 6, kind: input, shape index: {}]
  %s7 = inlined_call_operand.vmem [shape: f32[48,128], index: 7, kind: output, shape index: {}]
  %s8 = sld [smem:[#allocation0]]
  $region61: #{r_actor_forward.1} parent=0
    _
  %s10 = ssub.s32 1, %s8
  %s11 = scalar_select 0, %s10, %s8
  loop: start=0, step=1, limit=4
  $region2: #{r_actor_forward.1} parent=0 // loop_pre_header
    _
  $region3: #{r_actor_forward.1} parent=0 // loop_header
    %s13 = sphi 0, %s17
    %p14 = scmp.ge.s32.totalorder %s13, 4
    %s23 = sphi 0, %s25
    %s26 = sphi 0, %s23
    %s27 = sphi 0, %s26
    %s43 = sphi 0, %s27
    %s47 = sphi 0, %s47
    %s49 = sphi 0, %s47
    %s50 = sphi 0, %s49
    %s64 = sphi 0, %s50
    %s68 = sphi 0, %s68
    %s70 = sphi 0, %s68
    %s71 = sphi 0, %s70
    %s85 = sphi 0, %s71
    %s89 = sphi 0, %s89
    %s91 = sphi 0, %s89
    %s92 = sphi 0, %s91
    %s106 = sphi 0, %s92
    %s110 = sphi 0, %s110
    %s112 = sphi 0, %s110
    %s113 = sphi 0, %s112
    %s127 = sphi 0, %s113
    %s131 = sphi 0, %s131
    %s133 = sphi 0, %s131
    %s134 = sphi 0, %s133
    %s148 = sphi 0, %s134
    %s152 = sphi 0, %s152
    %s154 = sphi 0, %s152
    %s155 = sphi 0, %s154
    %s169 = sphi 0, %s155
    %s175 = sphi 0, %s177
    %s178 = sphi 0, %s175
    %s179 = sphi 0, %s178
    %s195 = sphi 0, %s179
  $region4: #{r_actor_forward.1} parent=0 // loop_header_branch
    %16 = sbr.rel (%p14) target = $region8
  $region5: #{r_actor_forward.1} parent=0 // loop_body
    %s18 = ssub.s32 %s13, 1
    %s19 = ssub.s32 %s13, 2
    %s20 = sadd.s32 %s13, 1
    %s21 = ssub.s32 %s13, %s20
    %p22 = scmp.eq.s32.totalorder %s21, 0
    %s24 = sadd.s32 %s23, 1
    %s25 = scalar_select %p22, %s23, %s24
    %p28 = pneg %p22
    %p29 = scmp.eq.s32.totalorder %s13, 1
    %p30 = por %p28, %p29
    %p31 = scmp.ne.s32.totalorder %s23, %s26
    %p32 = scmp.eq.s32.totalorder %s13, 0
    %p33 = por %p31, %p32
    %p34 = scmp.ne.s32.totalorder %s23, %s26
    %p35 = scmp.eq.s32.totalorder %s18, 1
    %p36 = por %p34, %p35
    %p37 = scmp.ne.s32.totalorder %s26, %s27
    %p38 = scmp.eq.s32.totalorder %s18, 0
    %p39 = por %p37, %p38
    %p40 = scmp.ne.s32.totalorder %s26, %s27
    %p41 = scmp.eq.s32.totalorder %s19, 1
    %p42 = por %p40, %p41
    %p44 = scmp.ne.s32.totalorder %s27, %s43
    %p45 = scmp.eq.s32.totalorder %s19, 0
    %p46 = por %p44, %p45
    %s48 = sadd.s32 %s47, 1
    %p51 = scmp.eq.s32.totalorder %s13, 1
    %p52 = scmp.ne.s32.totalorder %s47, %s49
    %p53 = scmp.eq.s32.totalorder %s13, 0
    %p54 = por %p52, %p53
    %p55 = scmp.ne.s32.totalorder %s47, %s49
    %p56 = scmp.eq.s32.totalorder %s18, 1
    %p57 = por %p55, %p56
    %p58 = scmp.ne.s32.totalorder %s49, %s50
    %p59 = scmp.eq.s32.totalorder %s18, 0
    %p60 = por %p58, %p59
    %p61 = scmp.ne.s32.totalorder %s49, %s50
    %p62 = scmp.eq.s32.totalorder %s19, 1
    %p63 = por %p61, %p62
    %p65 = scmp.ne.s32.totalorder %s50, %s64
    %p66 = scmp.eq.s32.totalorder %s19, 0
    %p67 = por %p65, %p66
    %s69 = sadd.s32 %s68, 1
    %p72 = scmp.eq.s32.totalorder %s13, 1
    %p73 = scmp.ne.s32.totalorder %s68, %s70
    %p74 = scmp.eq.s32.totalorder %s13, 0
    %p75 = por %p73, %p74
    %p76 = scmp.ne.s32.totalorder %s68, %s70
    %p77 = scmp.eq.s32.totalorder %s18, 1
    %p78 = por %p76, %p77
    %p79 = scmp.ne.s32.totalorder %s70, %s71
    %p80 = scmp.eq.s32.totalorder %s18, 0
    %p81 = por %p79, %p80
    %p82 = scmp.ne.s32.totalorder %s70, %s71
    %p83 = scmp.eq.s32.totalorder %s19, 1
    %p84 = por %p82, %p83
    %p86 = scmp.ne.s32.totalorder %s71, %s85
    %p87 = scmp.eq.s32.totalorder %s19, 0
    %p88 = por %p86, %p87
    %s90 = sadd.s32 %s89, 1
    %p93 = scmp.eq.s32.totalorder %s13, 1
    %p94 = scmp.ne.s32.totalorder %s89, %s91
    %p95 = scmp.eq.s32.totalorder %s13, 0
    %p96 = por %p94, %p95
    %p97 = scmp.ne.s32.totalorder %s89, %s91
    %p98 = scmp.eq.s32.totalorder %s18, 1
    %p99 = por %p97, %p98
    %p100 = scmp.ne.s32.totalorder %s91, %s92
    %p101 = scmp.eq.s32.totalorder %s18, 0
    %p102 = por %p100, %p101
    %p103 = scmp.ne.s32.totalorder %s91, %s92
    %p104 = scmp.eq.s32.totalorder %s19, 1
    %p105 = por %p103, %p104
    %p107 = scmp.ne.s32.totalorder %s92, %s106
    %p108 = scmp.eq.s32.totalorder %s19, 0
    %p109 = por %p107, %p108
    %s111 = sadd.s32 %s110, 1
    %p114 = scmp.eq.s32.totalorder %s13, 1
    %p115 = scmp.ne.s32.totalorder %s110, %s112
    %p116 = scmp.eq.s32.totalorder %s13, 0
    %p117 = por %p115, %p116
    %p118 = scmp.ne.s32.totalorder %s110, %s112
    %p119 = scmp.eq.s32.totalorder %s18, 1
    %p120 = por %p118, %p119
    %p121 = scmp.ne.s32.totalorder %s112, %s113
    %p122 = scmp.eq.s32.totalorder %s18, 0
    %p123 = por %p121, %p122
    %p124 = scmp.ne.s32.totalorder %s112, %s113
    %p125 = scmp.eq.s32.totalorder %s19, 1
    %p126 = por %p124, %p125
    %p128 = scmp.ne.s32.totalorder %s113, %s127
    %p129 = scmp.eq.s32.totalorder %s19, 0
    %p130 = por %p128, %p129
    %s132 = sadd.s32 %s131, 1
    %p135 = scmp.eq.s32.totalorder %s13, 1
    %p136 = scmp.ne.s32.totalorder %s131, %s133
    %p137 = scmp.eq.s32.totalorder %s13, 0
    %p138 = por %p136, %p137
    %p139 = scmp.ne.s32.totalorder %s131, %s133
    %p140 = scmp.eq.s32.totalorder %s18, 1
    %p141 = por %p139, %p140
    %p142 = scmp.ne.s32.totalorder %s133, %s134
    %p143 = scmp.eq.s32.totalorder %s18, 0
    %p144 = por %p142, %p143
    %p145 = scmp.ne.s32.totalorder %s133, %s134
    %p146 = scmp.eq.s32.totalorder %s19, 1
    %p147 = por %p145, %p146
    %p149 = scmp.ne.s32.totalorder %s134, %s148
    %p150 = scmp.eq.s32.totalorder %s19, 0
    %p151 = por %p149, %p150
    %s153 = sadd.s32 %s152, 1
    %p156 = scmp.eq.s32.totalorder %s13, 1
    %p157 = scmp.ne.s32.totalorder %s152, %s154
    %p158 = scmp.eq.s32.totalorder %s13, 0
    %p159 = por %p157, %p158
    %p160 = scmp.ne.s32.totalorder %s152, %s154
    %p161 = scmp.eq.s32.totalorder %s18, 1
    %p162 = por %p160, %p161
    %p163 = scmp.ne.s32.totalorder %s154, %s155
    %p164 = scmp.eq.s32.totalorder %s18, 0
    %p165 = por %p163, %p164
    %p166 = scmp.ne.s32.totalorder %s154, %s155
    %p167 = scmp.eq.s32.totalorder %s19, 1
    %p168 = por %p166, %p167
    %p170 = scmp.ne.s32.totalorder %s155, %s169
    %p171 = scmp.eq.s32.totalorder %s19, 0
    %p172 = por %p170, %p171
    %s173 = ssub.s32 %s13, %s20
    %p174 = scmp.eq.s32.totalorder %s173, 0
    %s176 = sadd.s32 %s175, 1
    %s177 = scalar_select %p174, %s175, %s176
    %p180 = pneg %p174
    %p181 = scmp.eq.s32.totalorder %s13, 1
    %p182 = por %p180, %p181
    %p183 = scmp.ne.s32.totalorder %s175, %s178
    %p184 = scmp.eq.s32.totalorder %s13, 0
    %p185 = por %p183, %p184
    %p186 = scmp.ne.s32.totalorder %s175, %s178
    %p187 = scmp.eq.s32.totalorder %s18, 1
    %p188 = por %p186, %p187
    %p189 = scmp.ne.s32.totalorder %s178, %s179
    %p190 = scmp.eq.s32.totalorder %s18, 0
    %p191 = por %p189, %p190
    %p192 = scmp.ne.s32.totalorder %s178, %s179
    %p193 = scmp.eq.s32.totalorder %s19, 1
    %p194 = por %p192, %p193
    %p196 = scmp.ne.s32.totalorder %s179, %s195
    %p197 = scmp.eq.s32.totalorder %s19, 0
    %p198 = por %p196, %p197
    %p199 = scmp.le.s32.totalorder 1, %s13
    %p200 = scmp.lt.s32.totalorder %s13, 3
    %p201 = pnand %p199, %p200
    %p202 = pneg %p201
    // Predicated region
    $region9: #{r_actor_forward.1} parent=5 // pred_check
      _
    $region10: #{r_actor_forward.1} parent=5 // pred_check_branch
      %204 = sbr.rel (%p201) target = $region12
    $region11: #{r_actor_forward.1} parent=5 // pred_region
      %s205 = ssub.s32 %s13, 1
      // Predicated region
      $region13: #{r_actor_forward.1} parent=11 // pred_check
        %p206 = pneg %p60
      $region14: #{r_actor_forward.1} parent=11 // pred_check_branch
        %208 = sbr.rel (%p206) target = $region16
      $region15: #{r_actor_forward.1} parent=11 // pred_region
        _
      $region16: #{r_actor_forward.1} parent=11 // pred_fallthru
        _
      // Predicated region
      $region17: #{r_actor_forward.1} parent=11 // pred_check
        %p209 = pneg %p81
      $region18: #{r_actor_forward.1} parent=11 // pred_check_branch
        %211 = sbr.rel (%p209) target = $region20
      $region19: #{r_actor_forward.1} parent=11 // pred_region
        _
      $region20: #{r_actor_forward.1} parent=11 // pred_fallthru
        _
      // Predicated region
      $region21: #{r_actor_forward.1} parent=11 // pred_check
        %p212 = pneg %p102
      $region22: #{r_actor_forward.1} parent=11 // pred_check_branch
        %214 = sbr.rel (%p212) target = $region24
      $region23: #{r_actor_forward.1} parent=11 // pred_region
        _
      $region24: #{r_actor_forward.1} parent=11 // pred_fallthru
        _
      // Predicated region
      $region25: #{r_actor_forward.1} parent=11 // pred_check
        %p215 = pneg %p123
      $region26: #{r_actor_forward.1} parent=11 // pred_check_branch
        %217 = sbr.rel (%p215) target = $region28
      $region27: #{r_actor_forward.1} parent=11 // pred_region
        _
      $region28: #{r_actor_forward.1} parent=11 // pred_fallthru
        _
      // Predicated region
      $region29: #{r_actor_forward.1} parent=11 // pred_check
        %p218 = pneg %p144
      $region30: #{r_actor_forward.1} parent=11 // pred_check_branch
        %220 = sbr.rel (%p218) target = $region32
      $region31: #{r_actor_forward.1} parent=11 // pred_region
        _
      $region32: #{r_actor_forward.1} parent=11 // pred_fallthru
        _
      // Predicated region
      $region33: #{r_actor_forward.1} parent=11 // pred_check
        %p221 = pneg %p165
      $region34: #{r_actor_forward.1} parent=11 // pred_check_branch
        %223 = sbr.rel (%p221) target = $region36
      $region35: #{r_actor_forward.1} parent=11 // pred_region
        _
      $region36: #{r_actor_forward.1} parent=11 // pred_fallthru
        _
    $region12: #{r_actor_forward.1} parent=5 // pred_fallthru
      _
    %p224 = scmp.lt.s32.totalorder %s13, 2
    // Predicated region
    $region37: #{r_actor_forward.1} parent=5 // pred_check
      %p225 = pneg %p224
    $region38: #{r_actor_forward.1} parent=5 // pred_check_branch
      %227 = sbr.rel (%p225) target = $region40
    $region39: #{r_actor_forward.1} parent=5 // pred_region
      // Predicated region
      $region41: #{r_actor_forward.1} parent=39 // pred_check
        %p228 = pneg %p33
      $region42: #{r_actor_forward.1} parent=39 // pred_check_branch
        %230 = sbr.rel (%p228) target = $region44
      $region43: #{r_actor_forward.1} parent=39 // pred_region
        %s231 = smul.u32 3, %s13
        %p232 = scmp.lt.s32.totalorder %s231, 5
        %s233 = scalar_select %p232, %s231, 5
        %s234 = smul.addr %s233, 8
        %s235 = scalar_lea.vmem %s0, %s234
        %s236 = smul.u32 3, %s13
      $region44: #{r_actor_forward.1} parent=39 // pred_fallthru
        _
    $region40: #{r_actor_forward.1} parent=5 // pred_fallthru
      _
    %p237 = scmp.le.s32.totalorder 1, %s13
    %p238 = scmp.lt.s32.totalorder %s13, 3
    %p239 = pnand %p237, %p238
    %p240 = pneg %p239
    // Predicated region
    $region45: #{r_actor_forward.1} parent=5 // pred_check
      _
    $region46: #{r_actor_forward.1} parent=5 // pred_check_branch
      %242 = sbr.rel (%p239) target = $region48
    $region47: #{r_actor_forward.1} parent=5 // pred_region
      %s243 = ssub.s32 %s13, 1
      %s244 = smul.u32 3, %s18
      %p245 = scmp.lt.s32.totalorder %s244, 5
      %s246 = scalar_select %p245, %s244, 5
      %s247 = smul.addr %s246, 8
      %s248 = scalar_lea.vmem %s0, %s247
      %p249 = pneg %p39
      %p250 = pneg %p36
      %p251 = pneg %p60
      %p252 = pneg %p57
      %p253 = pneg %p81
      %p254 = pneg %p78
      %p255 = pneg %p102
      %p256 = pneg %p99
      %p257 = pneg %p123
      %p258 = pneg %p120
      %p259 = pneg %p144
      %p260 = pneg %p141
      %p261 = pneg %p165
      %p262 = pneg %p162
      %p263 = pneg %p191
      %p264 = pneg %p188
      %s265 = smul.u32 3, %s18
      %p266 = scmp.lt.s32.totalorder %s265, 5
      %s267 = scalar_select %p266, %s265, 5
      %s268 = smul.addr %s267, 8
      %s269 = scalar_lea.vmem %s7, %s268
      %s270 = smul.u32 3, %s18
      %p271 = scmp.lt.s32.totalorder %s270, 5
      %s272 = scalar_select %p271, %s270, 5
      %s273 = smul.addr %s272, 8
      %s274 = scalar_lea.vmem %s0, %s273
      %s275 = smul.u32 3, %s18
      %s276 = smul.u32 3, %s18
      %p277 = scmp.lt.s32.totalorder %s276, 5
      %s278 = scalar_select %p277, %s276, 5
      %s279 = smul.addr %s278, 8
      %s280 = scalar_lea.vmem %s7, %s279
      %s281 = smul.u32 3, %s18
      %v283 = vld [vmem:[%s274] sm:$0xff]
      %v284 = vld [vmem:[%s274 + $0x8] sm:$0xff]
      %v285 = vld [vmem:[%s274 + $0x10] sm:$0xff]
      %v286 = vld [vmem:[%s1] sm:$0x1]
      %v287 = vld [vmem:[%s1 + $0x1] sm:$0x1]
      %vm288 = vcmask 195584
      %v289 = vsel %vm288, %v283, 0.0
      %290 = vadd.xlane.f32.xlu0 %v289
      %v291 = vpop.xlane.xlu0 %290
      %v292 = vsel %vm288, %v284, 0.0
      %293 = vadd.xlane.f32.xlu0 %v292
      %v294 = vpop.xlane.xlu0 %293
      %v295 = vsel %vm288, %v285, 0.0
      %296 = vadd.xlane.f32.xlu0 %v295
      %v297 = vpop.xlane.xlu0 %296
      %v298 = vmul.f32 %v291, 0.041666668
      %v299 = vmul.f32 %v294, 0.041666668
      %v300 = vmul.f32 %v297, 0.041666668
      %v301 = vsub.f32 %v283, %v298
      %v302 = vsub.f32 %v284, %v299
      %v303 = vsub.f32 %v285, %v300
      %v304 = vmul.f32 %v301, %v301
      %v305 = vmul.f32 %v302, %v302
      %v306 = vmul.f32 %v303, %v303
      %v307 = vsel %vm288, %v304, 0.0
      %308 = vadd.xlane.f32.xlu0 %v307
      %v309 = vpop.xlane.xlu0 %308
      %v310 = vsel %vm288, %v305, 0.0
      %311 = vadd.xlane.f32.xlu0 %v310
      %v312 = vpop.xlane.xlu0 %311
      %v313 = vsel %vm288, %v306, 0.0
      %314 = vadd.xlane.f32.xlu0 %v313
      %v315 = vpop.xlane.xlu0 %314
      %v316 = vmul.f32 %v309, 0.041666668
      %v317 = vmul.f32 %v312, 0.041666668
      %v318 = vmul.f32 %v315, 0.041666668
      %v319 = vadd.f32 %v316, 1e-05
      %v320 = vadd.f32 %v317, 1e-05
      %v321 = vadd.f32 %v318, 1e-05
      %v322 = vrsqrt.pop %v319
      %v323 = vmul.f32 %v322, %v319
      %v324 = vmul.f32 %v323, %v322
      %v325 = vmul.f32 0.5, %v324
      %v326 = vsub.f32 1.5, %v325
      %v327 = vmul.f32 %v322, %v326
      %vm328 = vweird.f32 %v319
      %vm329 = vweird.f32 %v322
      %vm330 = vmor %vm328, %vm329
      %v331 = vsel %vm330, %v322, %v327
      %v332 = vrsqrt.pop %v320
      %v333 = vmul.f32 %v332, %v320
      %v334 = vmul.f32 %v333, %v332
      %v335 = vmul.f32 0.5, %v334
      %v336 = vsub.f32 1.5, %v335
      %v337 = vmul.f32 %v332, %v336
      %vm338 = vweird.f32 %v320
      %vm339 = vweird.f32 %v332
      %vm340 = vmor %vm338, %vm339
      %v341 = vsel %vm340, %v332, %v337
      %v342 = vrsqrt.pop %v321
      %v343 = vmul.f32 %v342, %v321
      %v344 = vmul.f32 %v343, %v342
      %v345 = vmul.f32 0.5, %v344
      %v346 = vsub.f32 1.5, %v345
      %v347 = vmul.f32 %v342, %v346
      %vm348 = vweird.f32 %v321
      %vm349 = vweird.f32 %v342
      %vm350 = vmor %vm348, %vm349
      %v351 = vsel %vm350, %v342, %v347
      %v352 = vmul.f32 %v301, %v331
      %v353 = vmul.f32 %v302, %v341
      %v354 = vmul.f32 %v303, %v351
      %v355 = vperm.slane %v286, 0
      %v356 = vmul.f32 %v352, %v355
      %v357 = vmul.f32 %v353, %v355
      %v358 = vmul.f32 %v354, %v355
      %v359 = vperm.slane %v287, 0
      %v360 = vadd.f32 %v356, %v359
      %v361 = vadd.f32 %v357, %v359
      %v362 = vadd.f32 %v358, %v359
      %v363 = vld [vmem:[%s2] sm:$0xf]
      %v364 = vld [vmem:[%s2 + $0x4] sm:$0xf]
      %v365 = vld [vmem:[%s2 + $0x8] sm:$0xf]
      %v366 = vpack.c.bf16 %v361, %v360
      %v367 = vpack.c.bf16 %v362, %v362
      %v368 = vld [vmem:[%s3] sm:$0x1]
      %v369 = vperm.slane %v368, 0
      %v373 = vunpack.c.l.b16 %v363
      %v374 = vunpack.c.l.b16 %v364
      %v375 = vunpack.c.l.b16 %v365
      %v376 = vpack.c.b16 %v374, %v373
      %v377 = vpack.c.b16 %v375, %v375
      %v380 = vsel %vm288, %v366, 0
      %v383 = vsel %vm288, %v367, 0
      %vm385 = vcmask 1043456
      %v387 = vsel %vm385, %v377, 0
      %389 = vmatpush.bf16.msra.mxu0 0
      %390 = vmatpush.bf16.msra.mxu0 0
      %391 = vmatpush.bf16.msra.mxu0 0
      %392 = vmatpush.bf16.msra.mxu0 0
      %393 = vmatpush.bf16.msra.mxu0 0
      %394 = vmatpush.bf16.msra.mxu0 0
      %395 = vmatpush.bf16.msra.mxu0 %v387
      %396 = vmatpush.bf16.msra.mxu0 %v376
      %397 = vmatmul.bf16.gmra.mxu0 %v380
      %v398 = vpop.f32.mrf.mxu0
      %v399 = vadd.f32 %v369, %v398
      %v400 = vpop.f32.mrf.mxu0
      %v401 = vadd.f32 %v369, %v400
      %402 = vmatmul.bf16.gmra.mxu0 %v383
      %v403 = vpop.f32.mrf.mxu0
      %v404 = vadd.f32 %v369, %v403
      %v405 = vpop.f32.mrf.mxu0
      %406 = vdwg.mxu0
      %v407 = vmax.f32 %v399, 0.0
      %v408 = vmax.f32 %v401, 0.0
      %v409 = vmax.f32 %v404, 0.0
      %v410 = vld [vmem:[%s3 + $0x1] sm:$0x1]
      %v411 = vld [vmem:[%s3 + $0x2] sm:$0x1]
      %vm412 = vcmask 261120
      %v413 = vsel %vm412, %v407, 0.0
      %414 = vadd.xlane.f32.xlu0 %v413
      %v415 = vpop.xlane.xlu0 %414
      %v416 = vsel %vm412, %v408, 0.0
      %417 = vadd.xlane.f32.xlu0 %v416
      %v418 = vpop.xlane.xlu0 %417
      %v419 = vsel %vm412, %v409, 0.0
      %420 = vadd.xlane.f32.xlu0 %v419
      %v421 = vpop.xlane.xlu0 %420
      %v422 = vmul.f32 %v415, 0.03125
      %v423 = vmul.f32 %v418, 0.03125
      %v424 = vmul.f32 %v421, 0.03125
      %v425 = vsub.f32 %v407, %v422
      %v426 = vsub.f32 %v408, %v423
      %v427 = vsub.f32 %v409, %v424
      %v428 = vmul.f32 %v425, %v425
      %v429 = vmul.f32 %v426, %v426
      %v430 = vmul.f32 %v427, %v427
      %v431 = vsel %vm412, %v428, 0.0
      %432 = vadd.xlane.f32.xlu0 %v431
      %v433 = vpop.xlane.xlu0 %432
      %v434 = vsel %vm412, %v429, 0.0
      %435 = vadd.xlane.f32.xlu0 %v434
      %v436 = vpop.xlane.xlu0 %435
      %v437 = vsel %vm412, %v430, 0.0
      %438 = vadd.xlane.f32.xlu0 %v437
      %v439 = vpop.xlane.xlu0 %438
      %v440 = vmul.f32 %v433, 0.03125
      %v441 = vmul.f32 %v436, 0.03125
      %v442 = vmul.f32 %v439, 0.03125
      %v443 = vadd.f32 %v440, 1e-05
      %v444 = vadd.f32 %v441, 1e-05
      %v445 = vadd.f32 %v442, 1e-05
      %v446 = vrsqrt.pop %v443
      %v447 = vmul.f32 %v446, %v443
      %v448 = vmul.f32 %v447, %v446
      %v449 = vmul.f32 0.5, %v448
      %v450 = vsub.f32 1.5, %v449
      %v451 = vmul.f32 %v446, %v450
      %vm452 = vweird.f32 %v443
      %vm453 = vweird.f32 %v446
      %vm454 = vmor %vm452, %vm453
      %v455 = vsel %vm454, %v446, %v451
      %v456 = vrsqrt.pop %v444
      %v457 = vmul.f32 %v456, %v444
      %v458 = vmul.f32 %v457, %v456
      %v459 = vmul.f32 0.5, %v458
      %v460 = vsub.f32 1.5, %v459
      %v461 = vmul.f32 %v456, %v460
      %vm462 = vweird.f32 %v444
      %vm463 = vweird.f32 %v456
      %vm464 = vmor %vm462, %vm463
      %v465 = vsel %vm464, %v456, %v461
      %v466 = vrsqrt.pop %v445
      %v467 = vmul.f32 %v466, %v445
      %v468 = vmul.f32 %v467, %v466
      %v469 = vmul.f32 0.5, %v468
      %v470 = vsub.f32 1.5, %v469
      %v471 = vmul.f32 %v466, %v470
      %vm472 = vweird.f32 %v445
      %vm473 = vweird.f32 %v466
      %vm474 = vmor %vm472, %vm473
      %v475 = vsel %vm474, %v466, %v471
      %v476 = vmul.f32 %v425, %v455
      %v477 = vmul.f32 %v426, %v465
      %v478 = vmul.f32 %v427, %v475
      %v479 = vperm.slane %v410, 0
      %v480 = vmul.f32 %v476, %v479
      %v481 = vmul.f32 %v477, %v479
      %v482 = vmul.f32 %v478, %v479
      %v483 = vperm.slane %v411, 0
      %v484 = vadd.f32 %v480, %v483
      %v485 = vadd.f32 %v481, %v483
      %v486 = vadd.f32 %v482, %v483
      %v487 = vld [vmem:[%s4] sm:$0xf]
      %v488 = vld [vmem:[%s4 + $0x10] sm:$0xf]
      %v489 = vld [vmem:[%s4 + $0x20] sm:$0xf]
      %v490 = vld [vmem:[%s4 + $0x30] sm:$0xf]
      %v491 = vpack.c.bf16 %v485, %v484
      %v492 = vpack.c.bf16 %v486, %v486
      %v493 = vld [vmem:[%s3 + $0x3] sm:$0x1]
      %v494 = vperm.slane %v493, 0
      %v499 = vunpack.c.l.b16 %v487
      %v500 = vunpack.c.l.b16 %v488
      %v501 = vunpack.c.l.b16 %v489
      %v502 = vunpack.c.l.b16 %v490
      %v503 = vpack.c.b16 %v500, %v499
      %v504 = vpack.c.b16 %v502, %v501
      %v508 = vsel %vm412, %v491, 0
      %v511 = vsel %vm412, %v492, 0
      %513 = vmatpush.bf16.msra.mxu0 0
      %514 = vmatpush.bf16.msra.mxu0 0
      %515 = vmatpush.bf16.msra.mxu0 0
      %516 = vmatpush.bf16.msra.mxu0 0
      %517 = vmatpush.bf16.msra.mxu0 0
      %518 = vmatpush.bf16.msra.mxu0 0
      %519 = vmatpush.bf16.msra.mxu0 %v504
      %520 = vmatpush.bf16.msra.mxu0 %v503
      %521 = vmatmul.bf16.gmra.mxu0 %v508
      %v522 = vpop.f32.mrf.mxu0
      %v523 = vadd.f32 %v494, %v522
      %v524 = vpop.f32.mrf.mxu0
      %v525 = vadd.f32 %v494, %v524
      %526 = vmatmul.bf16.gmra.mxu0 %v511
      %v527 = vpop.f32.mrf.mxu0
      %v528 = vadd.f32 %v494, %v527
      %v529 = vpop.f32.mrf.mxu0
      %530 = vdwg.mxu0
      %v531 = vmax.f32 %v523, 0.0
      %v532 = vmax.f32 %v525, 0.0
      %v533 = vmax.f32 %v528, 0.0
      %v534 = vld [vmem:[%s3 + $0x4] sm:$0x1]
      %v535 = vld [vmem:[%s3 + $0x5] sm:$0x1]
      %v536 = vsel %vm412, %v531, 0.0
      %537 = vadd.xlane.f32.xlu0 %v536
      %v538 = vpop.xlane.xlu0 %537
      %v539 = vsel %vm412, %v532, 0.0
      %540 = vadd.xlane.f32.xlu0 %v539
      %v541 = vpop.xlane.xlu0 %540
      %v542 = vsel %vm412, %v533, 0.0
      %543 = vadd.xlane.f32.xlu0 %v542
      %v544 = vpop.xlane.xlu0 %543
      %v545 = vmul.f32 %v538, 0.03125
      %v546 = vmul.f32 %v541, 0.03125
      %v547 = vmul.f32 %v544, 0.03125
      %v548 = vsub.f32 %v531, %v545
      %v549 = vsub.f32 %v532, %v546
      %v550 = vsub.f32 %v533, %v547
      %v551 = vmul.f32 %v548, %v548
      %v552 = vmul.f32 %v549, %v549
      %v553 = vmul.f32 %v550, %v550
      %v554 = vsel %vm412, %v551, 0.0
      %555 = vadd.xlane.f32.xlu0 %v554
      %v556 = vpop.xlane.xlu0 %555
      %v557 = vsel %vm412, %v552, 0.0
      %558 = vadd.xlane.f32.xlu0 %v557
      %v559 = vpop.xlane.xlu0 %558
      %v560 = vsel %vm412, %v553, 0.0
      %561 = vadd.xlane.f32.xlu0 %v560
      %v562 = vpop.xlane.xlu0 %561
      %v563 = vmul.f32 %v556, 0.03125
      %v564 = vmul.f32 %v559, 0.03125
      %v565 = vmul.f32 %v562, 0.03125
      %v566 = vadd.f32 %v563, 1e-05
      %v567 = vadd.f32 %v564, 1e-05
      %v568 = vadd.f32 %v565, 1e-05
      %v569 = vrsqrt.pop %v566
      %v570 = vmul.f32 %v569, %v566
      %v571 = vmul.f32 %v570, %v569
      %v572 = vmul.f32 0.5, %v571
      %v573 = vsub.f32 1.5, %v572
      %v574 = vmul.f32 %v569, %v573
      %vm575 = vweird.f32 %v566
      %vm576 = vweird.f32 %v569
      %vm577 = vmor %vm575, %vm576
      %v578 = vsel %vm577, %v569, %v574
      %v579 = vrsqrt.pop %v567
      %v580 = vmul.f32 %v579, %v567
      %v581 = vmul.f32 %v580, %v579
      %v582 = vmul.f32 0.5, %v581
      %v583 = vsub.f32 1.5, %v582
      %v584 = vmul.f32 %v579, %v583
      %vm585 = vweird.f32 %v567
      %vm586 = vweird.f32 %v579
      %vm587 = vmor %vm585, %vm586
      %v588 = vsel %vm587, %v579, %v584
      %v589 = vrsqrt.pop %v568
      %v590 = vmul.f32 %v589, %v568
      %v591 = vmul.f32 %v590, %v589
      %v592 = vmul.f32 0.5, %v591
      %v593 = vsub.f32 1.5, %v592
      %v594 = vmul.f32 %v589, %v593
      %vm595 = vweird.f32 %v568
      %vm596 = vweird.f32 %v589
      %vm597 = vmor %vm595, %vm596
      %v598 = vsel %vm597, %v589, %v594
      %v599 = vmul.f32 %v548, %v578
      %v600 = vmul.f32 %v549, %v588
      %v601 = vmul.f32 %v550, %v598
      %v602 = vperm.slane %v534, 0
      %v603 = vmul.f32 %v599, %v602
      %v604 = vmul.f32 %v600, %v602
      %v605 = vmul.f32 %v601, %v602
      %v606 = vperm.slane %v535, 0
      %v607 = vadd.f32 %v603, %v606
      %v608 = vadd.f32 %v604, %v606
      %v609 = vadd.f32 %v605, %v606
      %611 = vset.pattern.permute.xlu0 56
      %612 = vperm.xlu0 %611, %v283
      %v613 = vpop.permute.xlu0 %612
      %616 = vset.pattern.permute.xlu0 56
      %617 = vperm.xlu0 %616, %v284
      %v618 = vpop.permute.xlu0 %617
      %621 = vset.pattern.permute.xlu0 56
      %622 = vperm.xlu0 %621, %v285
      %v623 = vpop.permute.xlu0 %622
      %v625 = vmul.f32 %v283, %v613
      %v626 = vmul.f32 %v284, %v618
      %v627 = vmul.f32 %v285, %v623
      %v628 = vld [vmem:[%s4 + $0x4] sm:$0xf]
      %v629 = vld [vmem:[%s4 + $0x14] sm:$0xf]
      %v630 = vld [vmem:[%s4 + $0x24] sm:$0xf]
      %v631 = vld [vmem:[%s4 + $0x34] sm:$0xf]
      %v632 = vld [vmem:[%s4 + $0x8] sm:$0xf]
      %v633 = vld [vmem:[%s4 + $0x18] sm:$0xf]
      %v634 = vld [vmem:[%s4 + $0x28] sm:$0xf]
      %v635 = vld [vmem:[%s4 + $0x38] sm:$0xf]
      %v636 = vpack.c.bf16 %v608, %v607
      %v637 = vpack.c.bf16 %v609, %v609
      %v638 = vld [vmem:[%s5] sm:$0x1]
      %v639 = vperm.slane %v638, 0
      %v644 = vunpack.c.l.b16 %v628
      %v645 = vunpack.c.l.b16 %v629
      %v646 = vunpack.c.l.b16 %v630
      %v647 = vunpack.c.l.b16 %v631
      %v648 = vpack.c.b16 %v645, %v644
      %v649 = vpack.c.b16 %v647, %v646
      %v653 = vsel %vm412, %v636, 0
      %v656 = vsel %vm412, %v637, 0
      %658 = vmatpush.bf16.msra.mxu0 0
      %659 = vmatpush.bf16.msra.mxu0 0
      %660 = vmatpush.bf16.msra.mxu0 0
      %661 = vmatpush.bf16.msra.mxu0 0
      %662 = vmatpush.bf16.msra.mxu0 0
      %663 = vmatpush.bf16.msra.mxu0 0
      %664 = vmatpush.bf16.msra.mxu0 %v649
      %665 = vmatpush.bf16.msra.mxu0 %v648
      %666 = vmatmul.bf16.gmra.mxu0 %v653
      %v667 = vpop.f32.mrf.mxu0
      %v668 = vadd.f32 %v639, %v667
      %v669 = vpop.f32.mrf.mxu0
      %v670 = vadd.f32 %v639, %v669
      %671 = vmatmul.bf16.gmra.mxu0 %v656
      %v672 = vpop.f32.mrf.mxu0
      %v673 = vadd.f32 %v639, %v672
      %v674 = vpop.f32.mrf.mxu0
      %675 = vdwg.mxu0
      %v676 = vpack.c.bf16 %v626, %v625
      %v677 = vpack.c.bf16 %v627, %v627
      %v678 = vld [vmem:[%s5 + $0x1] sm:$0x1]
      %v679 = vperm.slane %v678, 0
      %682 = vrot.lane.b32.xlu0 %v676, 104
      %v683 = vpop.permute.xlu0 %682
      %684 = vrot.lane.b32.xlu0 %v677, 104
      %v685 = vpop.permute.xlu0 %684
      %v690 = vunpack.c.l.b16 %v632
      %v691 = vunpack.c.l.b16 %v633
      %v692 = vunpack.c.l.b16 %v634
      %v693 = vunpack.c.l.b16 %v635
      %v694 = vpack.c.b16 %v691, %v690
      %v695 = vpack.c.b16 %v693, %v692
      %v699 = vsel %vm412, %v683, 0
      %v702 = vsel %vm412, %v685, 0
      %704 = vmatpush.bf16.msra.mxu0 0
      %705 = vmatpush.bf16.msra.mxu0 0
      %706 = vmatpush.bf16.msra.mxu0 0
      %707 = vmatpush.bf16.msra.mxu0 0
      %708 = vmatpush.bf16.msra.mxu0 0
      %709 = vmatpush.bf16.msra.mxu0 0
      %710 = vmatpush.bf16.msra.mxu0 %v695
      %711 = vmatpush.bf16.msra.mxu0 %v694
      %712 = vmatmul.bf16.gmra.mxu0 %v699
      %v713 = vpop.f32.mrf.mxu0
      %v714 = vadd.f32 %v679, %v713
      %v715 = vpop.f32.mrf.mxu0
      %v716 = vadd.f32 %v679, %v715
      %717 = vmatmul.bf16.gmra.mxu0 %v702
      %v718 = vpop.f32.mrf.mxu0
      %v719 = vadd.f32 %v679, %v718
      %v720 = vpop.f32.mrf.mxu0
      %721 = vdwg.mxu0
      %v722 = vadd.f32 %v668, %v714
      %v723 = vadd.f32 %v670, %v716
      %v724 = vadd.f32 %v673, %v719
      %v725 = vxor.u32 %v722, 2147483648
      %v726 = vxor.u32 %v723, 2147483648
      %v727 = vxor.u32 %v724, 2147483648
      %v728 = vmul.f32 %v725, 1.442695
      %v729 = vpow.pop %v728
      %v730 = vmul.f32 %v726, 1.442695
      %v731 = vpow.pop %v730
      %v732 = vmul.f32 %v727, 1.442695
      %v733 = vpow.pop %v732
      %v734 = vadd.f32 %v729, 1.0
      %v735 = vadd.f32 %v731, 1.0
      %v736 = vadd.f32 %v733, 1.0
      %v737 = vrcp.pop %v734
      %v738 = vmul.f32 %v734, %v737
      %v739 = vsub.f32 1.0, %v738
      %v740 = vmul.f32 %v737, %v739
      %v741 = vadd.f32 %v737, %v740
      %vm742 = vweird.f32 %v734
      %vm743 = vweird.f32 %v737
      %vm744 = vmor %vm742, %vm743
      %v745 = vsel %vm744, %v737, %v741
      %v746 = vand.u32 2147483647, %v734
      %vm747 = vcmp.eq.f32.partialorder %v746, 8.507059e+37
      %v748 = vand.u32 %v734, 2147483648
      %v749 = vor.u32 1.1754944e-38, %v748
      %v750 = vsel %vm747, %v749, %v745
      %v751 = vmul.f32 1.0, %v750
      %v752 = vrcp.pop %v735
      %v753 = vmul.f32 %v735, %v752
      %v754 = vsub.f32 1.0, %v753
      %v755 = vmul.f32 %v752, %v754
      %v756 = vadd.f32 %v752, %v755
      %vm757 = vweird.f32 %v735
      %vm758 = vweird.f32 %v752
      %vm759 = vmor %vm757, %vm758
      %v760 = vsel %vm759, %v752, %v756
      %v761 = vand.u32 2147483647, %v735
      %vm762 = vcmp.eq.f32.partialorder %v761, 8.507059e+37
      %v763 = vand.u32 %v735, 2147483648
      %v764 = vor.u32 1.1754944e-38, %v763
      %v765 = vsel %vm762, %v764, %v760
      %v766 = vmul.f32 1.0, %v765
      %v767 = vrcp.pop %v736
      %v768 = vmul.f32 %v736, %v767
      %v769 = vsub.f32 1.0, %v768
      %v770 = vmul.f32 %v767, %v769
      %v771 = vadd.f32 %v767, %v770
      %vm772 = vweird.f32 %v736
      %vm773 = vweird.f32 %v767
      %vm774 = vmor %vm772, %vm773
      %v775 = vsel %vm774, %v767, %v771
      %v776 = vand.u32 2147483647, %v736
      %vm777 = vcmp.eq.f32.partialorder %v776, 8.507059e+37
      %v778 = vand.u32 %v736, 2147483648
      %v779 = vor.u32 1.1754944e-38, %v778
      %v780 = vsel %vm777, %v779, %v775
      %v781 = vmul.f32 1.0, %v780
      %785 = vrot.lane.b32.xlu0 %v714, 64
      %v786 = vpop.permute.xlu0 %785
      %787 = vrot.lane.b32.xlu0 %v716, 64
      %v788 = vpop.permute.xlu0 %787
      %789 = vrot.lane.b32.xlu0 %v719, 64
      %v790 = vpop.permute.xlu0 %789
      %v794 = vmul.f32 %v751, %v786
      %v795 = vmul.f32 %v766, %v788
      %v796 = vmul.f32 %v781, %v790
      %800 = vrot.lane.b32.xlu0 %v794, 64
      %v801 = vpop.permute.xlu0 %800
      %802 = vrot.lane.b32.xlu0 %v795, 64
      %v803 = vpop.permute.xlu0 %802
      %804 = vrot.lane.b32.xlu0 %v796, 64
      %v805 = vpop.permute.xlu0 %804
      %v809 = vadd.f32 %v668, %v801
      %v810 = vadd.f32 %v670, %v803
      %v811 = vadd.f32 %v673, %v805
      %v812 = vtanh.pop %v809
      %v813 = vtanh.pop %v810
      %v814 = vtanh.pop %v811
      %v815 = vsub.f32 1.0, %v751
      %v816 = vsub.f32 1.0, %v766
      %v817 = vsub.f32 1.0, %v781
      %821 = vrot.lane.b32.xlu0 %v812, 96
      %v822 = vpop.permute.xlu0 %821
      %823 = vrot.lane.b32.xlu0 %v813, 96
      %v824 = vpop.permute.xlu0 %823
      %825 = vrot.lane.b32.xlu0 %v814, 96
      %v826 = vpop.permute.xlu0 %825
      %v830 = vmul.f32 %v815, %v822
      %v831 = vmul.f32 %v816, %v824
      %v832 = vmul.f32 %v817, %v826
      %836 = vrot.lane.b32.xlu0 %v625, 8
      %v837 = vpop.permute.xlu0 %836
      %838 = vrot.lane.b32.xlu0 %v626, 8
      %v839 = vpop.permute.xlu0 %838
      %840 = vrot.lane.b32.xlu0 %v627, 8
      %v841 = vpop.permute.xlu0 %840
      %v845 = vmul.f32 %v751, %v837
      %v846 = vmul.f32 %v766, %v839
      %v847 = vmul.f32 %v781, %v841
      %v848 = vadd.f32 %v830, %v845
      %v849 = vadd.f32 %v831, %v846
      %v850 = vadd.f32 %v832, %v847
      %v851 = vld [vmem:[%s3 + $0x6] sm:$0x1]
      %v852 = vld [vmem:[%s3 + $0x7] sm:$0x1]
      %856 = vrot.lane.b32.xlu0 %v848, 96
      %v857 = vpop.permute.xlu0 %856
      %858 = vrot.lane.b32.xlu0 %v849, 96
      %v859 = vpop.permute.xlu0 %858
      %860 = vrot.lane.b32.xlu0 %v850, 96
      %v861 = vpop.permute.xlu0 %860
      %v865 = vsel %vm412, %v857, 0.0
      %866 = vadd.xlane.f32.xlu0 %v865
      %v867 = vpop.xlane.xlu0 %866
      %v868 = vsel %vm412, %v859, 0.0
      %869 = vadd.xlane.f32.xlu0 %v868
      %v870 = vpop.xlane.xlu0 %869
      %v871 = vsel %vm412, %v861, 0.0
      %872 = vadd.xlane.f32.xlu0 %v871
      %v873 = vpop.xlane.xlu0 %872
      %v874 = vmul.f32 %v867, 0.03125
      %v875 = vmul.f32 %v870, 0.03125
      %v876 = vmul.f32 %v873, 0.03125
      %v877 = vsub.f32 %v848, %v874
      %v878 = vsub.f32 %v849, %v875
      %v879 = vsub.f32 %v850, %v876
      %v880 = vmul.f32 %v877, %v877
      %v881 = vmul.f32 %v878, %v878
      %v882 = vmul.f32 %v879, %v879
      %886 = vrot.lane.b32.xlu0 %v880, 96
      %v887 = vpop.permute.xlu0 %886
      %888 = vrot.lane.b32.xlu0 %v881, 96
      %v889 = vpop.permute.xlu0 %888
      %890 = vrot.lane.b32.xlu0 %v882, 96
      %v891 = vpop.permute.xlu0 %890
      %v895 = vsel %vm412, %v887, 0.0
      %896 = vadd.xlane.f32.xlu0 %v895
      %v897 = vpop.xlane.xlu0 %896
      %v898 = vsel %vm412, %v889, 0.0
      %899 = vadd.xlane.f32.xlu0 %v898
      %v900 = vpop.xlane.xlu0 %899
      %v901 = vsel %vm412, %v891, 0.0
      %902 = vadd.xlane.f32.xlu0 %v901
      %v903 = vpop.xlane.xlu0 %902
      %v904 = vmul.f32 %v897, 0.03125
      %v905 = vmul.f32 %v900, 0.03125
      %v906 = vmul.f32 %v903, 0.03125
      %v907 = vadd.f32 %v904, 1e-05
      %v908 = vadd.f32 %v905, 1e-05
      %v909 = vadd.f32 %v906, 1e-05
      %v910 = vrsqrt.pop %v907
      %v911 = vmul.f32 %v910, %v907
      %v912 = vmul.f32 %v911, %v910
      %v913 = vmul.f32 0.5, %v912
      %v914 = vsub.f32 1.5, %v913
      %v915 = vmul.f32 %v910, %v914
      %vm916 = vweird.f32 %v907
      %vm917 = vweird.f32 %v910
      %vm918 = vmor %vm916, %vm917
      %v919 = vsel %vm918, %v910, %v915
      %v920 = vrsqrt.pop %v908
      %v921 = vmul.f32 %v920, %v908
      %v922 = vmul.f32 %v921, %v920
      %v923 = vmul.f32 0.5, %v922
      %v924 = vsub.f32 1.5, %v923
      %v925 = vmul.f32 %v920, %v924
      %vm926 = vweird.f32 %v908
      %vm927 = vweird.f32 %v920
      %vm928 = vmor %vm926, %vm927
      %v929 = vsel %vm928, %v920, %v925
      %v930 = vrsqrt.pop %v909
      %v931 = vmul.f32 %v930, %v909
      %v932 = vmul.f32 %v931, %v930
      %v933 = vmul.f32 0.5, %v932
      %v934 = vsub.f32 1.5, %v933
      %v935 = vmul.f32 %v930, %v934
      %vm936 = vweird.f32 %v909
      %vm937 = vweird.f32 %v930
      %vm938 = vmor %vm936, %vm937
      %v939 = vsel %vm938, %v930, %v935
      %v940 = vmul.f32 %v877, %v919
      %v941 = vmul.f32 %v878, %v929
      %v942 = vmul.f32 %v879, %v939
      %v943 = vperm.slane %v851, 0
      %945 = vrot.lane.b32.xlu0 %v943, 32
      %v946 = vpop.permute.xlu0 %945
      %v948 = vmul.f32 %v940, %v946
      %v949 = vmul.f32 %v941, %v946
      %v950 = vmul.f32 %v942, %v946
      %v951 = vperm.slane %v852, 0
      %953 = vrot.lane.b32.xlu0 %v951, 32
      %v954 = vpop.permute.xlu0 %953
      %v956 = vadd.f32 %v948, %v954
      %v957 = vadd.f32 %v949, %v954
      %v958 = vadd.f32 %v950, %v954
      %v959 = vld [vmem:[%s4 + $0xc] sm:$0xf]
      %v960 = vld [vmem:[%s4 + $0x1c] sm:$0xf]
      %v961 = vld [vmem:[%s4 + $0x2c] sm:$0xf]
      %v962 = vld [vmem:[%s4 + $0x3c] sm:$0xf]
      %v963 = vpack.c.bf16 %v957, %v956
      %v964 = vpack.c.bf16 %v958, %v958
      %v965 = vld [vmem:[%s6] sm:$0x1]
      %v967 = vperm.slane %v965, 0
      %971 = vrot.lane.b32.xlu0 %v963, 96
      %v972 = vpop.permute.xlu0 %971
      %973 = vrot.lane.b32.xlu0 %v964, 96
      %v974 = vpop.permute.xlu0 %973
      %v979 = vunpack.c.l.b16 %v959
      %v980 = vunpack.c.l.b16 %v960
      %v981 = vunpack.c.l.b16 %v961
      %v982 = vunpack.c.l.b16 %v962
      %v983 = vpack.c.b16 %v980, %v979
      %v984 = vpack.c.b16 %v982, %v981
      %v988 = vsel %vm412, %v972, 0
      %v991 = vsel %vm412, %v974, 0
      %993 = vmatpush.bf16.msra.mxu0 0
      %994 = vmatpush.bf16.msra.mxu0 0
      %995 = vmatpush.bf16.msra.mxu0 0
      %996 = vmatpush.bf16.msra.mxu0 0
      %997 = vmatpush.bf16.msra.mxu0 0
      %998 = vmatpush.bf16.msra.mxu0 0
      %999 = vmatpush.bf16.msra.mxu0 %v984
      %1000 = vmatpush.bf16.msra.mxu0 %v983
      %1001 = vmatmul.bf16.gmra.mxu0 %v988
      %v1002 = vpop.f32.mrf.mxu0
      %v1003 = vadd.f32 %v967, %v1002
      %v1004 = vpop.f32.mrf.mxu0
      %v1005 = vadd.f32 %v967, %v1004
      %1006 = vmatmul.bf16.gmra.mxu0 %v991
      %v1007 = vpop.f32.mrf.mxu0
      %v1008 = vadd.f32 %v967, %v1007
      %v1009 = vpop.f32.mrf.mxu0
      %1010 = vdwg.mxu0
      %vm1011 = vcmp.gt.f32.partialorder %v283, 0.0
      %vm1012 = vcmp.gt.f32.partialorder %v284, 0.0
      %vm1013 = vcmp.gt.f32.partialorder %v285, 0.0
      %1017 = vrot.lane.b32.xlu0 %v1003, 62
      %v1018 = vpop.permute.xlu0 %1017
      %1019 = vrot.lane.b32.xlu0 %v1005, 62
      %v1020 = vpop.permute.xlu0 %1019
      %1021 = vrot.lane.b32.xlu0 %v1008, 62
      %v1022 = vpop.permute.xlu0 %1021
      %v1026 = vsel %vm1011, %v1018, -1e+10
      %v1027 = vsel %vm1012, %v1020, -1e+10
      %v1028 = vsel %vm1013, %v1022, -1e+10
      %1029 = vrot.lane.b32.xlu0 %v283, 5
      %v1030 = vpop.permute.xlu0 %1029
      %1031 = vrot.lane.b32.xlu0 %v284, 5
      %v1032 = vpop.permute.xlu0 %1031
      %1033 = vrot.lane.b32.xlu0 %v285, 5
      %v1034 = vpop.permute.xlu0 %1033
      %v1038 = vadd.f32 %v1026, %v1030
      %v1039 = vadd.f32 %v1027, %v1032
      %v1040 = vadd.f32 %v1028, %v1034
      %v1041 = vlaneseq
      %v1042 = vand.u32 %v1041, 127
      %vm1043 = vcmask 548336
      %v1044 = vsel %vm1043, %v1038, -inf
      %1045 = vmax.xlane.f32.xlu0 %v1044
      %v1046 = vpop.xlane.xlu0 %1045
      %v1047 = vsel %vm1043, %v1039, -inf
      %1048 = vmax.xlane.f32.xlu0 %v1047
      %v1049 = vpop.xlane.xlu0 %1048
      %v1050 = vsel %vm1043, %v1040, -inf
      %1051 = vmax.xlane.f32.xlu0 %v1050
      %v1052 = vpop.xlane.xlu0 %1051
      %vm1053 = vcmp.eq.f32.partialorder %v1038, %v1046
      %vm1054 = vcmp.eq.f32.partialorder %v1039, %v1049
      %vm1055 = vcmp.eq.f32.partialorder %v1040, %v1052
      %1056 = vrot.lane.b32.xlu0 %v1042, 62
      %v1057 = vpop.permute.xlu0 %1056
      %v1058 = vsel %vm1053, %v1057, 5
      %v1059 = vsel %vm1054, %v1057, 5
      %v1060 = vsel %vm1055, %v1057, 5
      %v1061 = vsel %vm1043, %v1058, 2147483647
      %v1062 = vand.u32 %v1061, 65535
      %v1063 = vshra.s32 %v1061, 16
      %v1064 = vcvt.s32.f32 %v1062
      %v1065 = vcvt.s32.f32 %v1063
      %1066 = vmin.xlane.f32.xlu0 %v1065
      %v1067 = vpop.xlane.xlu0 %1066
      %vm1068 = vcmp.eq.f32.partialorder %v1065, %v1067
      %v1069 = vsel %vm1068, %v1064, inf
      %1070 = vmin.xlane.f32.xlu0 %v1069
      %v1071 = vpop.xlane.xlu0 %1070
      %v1072 = vcvt.f32.s32 %v1071
      %v1073 = vcvt.f32.s32 %v1067
      %v1074 = vshll.u32 %v1073, 16
      %v1075 = vadd.s32 %v1074, %v1072
      %v1076 = vsel %vm1043, %v1059, 2147483647
      %v1077 = vand.u32 %v1076, 65535
      %v1078 = vshra.s32 %v1076, 16
      %v1079 = vcvt.s32.f32 %v1077
      %v1080 = vcvt.s32.f32 %v1078
      %1081 = vmin.xlane.f32.xlu0 %v1080
      %v1082 = vpop.xlane.xlu0 %1081
      %vm1083 = vcmp.eq.f32.partialorder %v1080, %v1082
      %v1084 = vsel %vm1083, %v1079, inf
      %1085 = vmin.xlane.f32.xlu0 %v1084
      %v1086 = vpop.xlane.xlu0 %1085
      %v1087 = vcvt.f32.s32 %v1086
      %v1088 = vcvt.f32.s32 %v1082
      %v1089 = vshll.u32 %v1088, 16
      %v1090 = vadd.s32 %v1089, %v1087
      %v1091 = vsel %vm1043, %v1060, 2147483647
      %v1092 = vand.u32 %v1091, 65535
      %v1093 = vshra.s32 %v1091, 16
      %v1094 = vcvt.s32.f32 %v1092
      %v1095 = vcvt.s32.f32 %v1093
      %1096 = vmin.xlane.f32.xlu0 %v1095
      %v1097 = vpop.xlane.xlu0 %1096
      %vm1098 = vcmp.eq.f32.partialorder %v1095, %v1097
      %v1099 = vsel %vm1098, %v1094, inf
      %1100 = vmin.xlane.f32.xlu0 %v1099
      %v1101 = vpop.xlane.xlu0 %1100
      %v1102 = vcvt.f32.s32 %v1101
      %v1103 = vcvt.f32.s32 %v1097
      %v1104 = vshll.u32 %v1103, 16
      %v1105 = vadd.s32 %v1104, %v1102
      %vm1106 = vcmp.eq.s32.totalorder %v1042, %v1075
      %vm1107 = vcmp.eq.s32.totalorder %v1042, %v1090
      %vm1108 = vcmp.eq.s32.totalorder %v1042, %v1105
      %v1109 = vsel %vm1106, 1, 0
      %v1110 = vsel %vm1107, 1, 0
      %v1111 = vsel %vm1108, 1, 0
      %v1112 = vcvt.s32.f32 %v1109
      %v1113 = vcvt.s32.f32 %v1110
      %v1114 = vcvt.s32.f32 %v1111
      %1118 = vrot.lane.b32.xlu0 %v1112, 62
      %v1119 = vpop.permute.xlu0 %1118
      %1120 = vrot.lane.b32.xlu0 %v1113, 62
      %v1121 = vpop.permute.xlu0 %1120
      %1122 = vrot.lane.b32.xlu0 %v1114, 62
      %v1123 = vpop.permute.xlu0 %1122
      %v1127 = vmul.f32 %v1026, %v1119
      %v1128 = vmul.f32 %v1027, %v1121
      %v1129 = vmul.f32 %v1028, %v1123
      %1133 = vrot.lane.b32.xlu0 %v1127, 66
      %v1134 = vpop.permute.xlu0 %1133
      %1135 = vrot.lane.b32.xlu0 %v1128, 66
      %v1136 = vpop.permute.xlu0 %1135
      %1137 = vrot.lane.b32.xlu0 %v1129, 66
      %v1138 = vpop.permute.xlu0 %1137
      %vm1142 = vcmask 39936
      %v1143 = vsel %vm1142, %v1134, 0.0
      %1144 = vadd.xlane.f32.xlu0 %v1143
      %v1145 = vpop.xlane.xlu0 %1144
      %v1146 = vsel %vm1142, %v1136, 0.0
      %1147 = vadd.xlane.f32.xlu0 %v1146
      %v1148 = vpop.xlane.xlu0 %1147
      %v1149 = vsel %vm1142, %v1138, 0.0
      %1150 = vadd.xlane.f32.xlu0 %v1149
      %v1151 = vpop.xlane.xlu0 %1150
      %v1152 = vsel %vm1043, %v1026, -inf
      %1153 = vmax.xlane.f32.xlu0 %v1152
      %v1154 = vpop.xlane.xlu0 %1153
      %v1155 = vsel %vm1043, %v1027, -inf
      %1156 = vmax.xlane.f32.xlu0 %v1155
      %v1157 = vpop.xlane.xlu0 %1156
      %v1158 = vsel %vm1043, %v1028, -inf
      %1159 = vmax.xlane.f32.xlu0 %v1158
      %v1160 = vpop.xlane.xlu0 %1159
      %v1161 = vsub.f32 %v1026, %v1154
      %v1162 = vsub.f32 %v1027, %v1157
      %v1163 = vsub.f32 %v1028, %v1160
      %v1164 = vmul.f32 %v1161, 1.442695
      %v1165 = vpow.pop %v1164
      %v1166 = vmul.f32 %v1162, 1.442695
      %v1167 = vpow.pop %v1166
      %v1168 = vmul.f32 %v1163, 1.442695
      %v1169 = vpow.pop %v1168
      %1173 = vrot.lane.b32.xlu0 %v1165, 66
      %v1174 = vpop.permute.xlu0 %1173
      %1175 = vrot.lane.b32.xlu0 %v1167, 66
      %v1176 = vpop.permute.xlu0 %1175
      %1177 = vrot.lane.b32.xlu0 %v1169, 66
      %v1178 = vpop.permute.xlu0 %1177
      %v1182 = vsel %vm1142, %v1174, 0.0
      %1183 = vadd.xlane.f32.xlu0 %v1182
      %v1184 = vpop.xlane.xlu0 %1183
      %v1185 = vsel %vm1142, %v1176, 0.0
      %1186 = vadd.xlane.f32.xlu0 %v1185
      %v1187 = vpop.xlane.xlu0 %1186
      %v1188 = vsel %vm1142, %v1178, 0.0
      %1189 = vadd.xlane.f32.xlu0 %v1188
      %v1190 = vpop.xlane.xlu0 %1189
      %v1191 = vlog2.pop %v1184
      %v1192 = vmul.f32 %v1191, 0.6931472
      %v1193 = vlog2.pop %v1187
      %v1194 = vmul.f32 %v1193, 0.6931472
      %v1195 = vlog2.pop %v1190
      %v1196 = vmul.f32 %v1195, 0.6931472
      %v1197 = vadd.f32 %v1154, %v1192
      %v1198 = vadd.f32 %v1157, %v1194
      %v1199 = vadd.f32 %v1160, %v1196
      %v1200 = vsub.f32 %v1145, %v1197
      %v1201 = vsub.f32 %v1148, %v1198
      %v1202 = vsub.f32 %v1151, %v1199
      %v1203 = vcvt.s32.f32 %v1075
      %v1204 = vcvt.s32.f32 %v1090
      %v1205 = vcvt.s32.f32 %v1105
      %v1206 = vsel %vm412, %v857, %v1200
      %v1207 = vsel %vm412, %v859, %v1201
      %v1208 = vsel %vm412, %v861, %v1202
      %vm1209 = vcmask 269312
      %v1210 = vsel %vm1209, %v1206, %v1203
      %v1211 = vsel %vm1209, %v1207, %v1204
      %v1212 = vsel %vm1209, %v1208, %v1205
      %vm1213 = vcmask 277504
      %v1214 = vsel %vm1213, %v1210, 0.0
      %v1215 = vsel %vm1213, %v1211, 0.0
      %v1216 = vsel %vm1213, %v1212, 0.0
      %1217 = vst [vmem:[%s280] sm:$0xff] %v1214
      %1218 = vst [vmem:[%s280 + $0x8] sm:$0xff] %v1215
      %1219 = vst [vmem:[%s280 + $0x10] sm:$0xff] %v1216
      %s1220 = smul.u32 3, %s18
      %p1221 = scmp.lt.s32.totalorder %s1220, 5
      %s1222 = scalar_select %p1221, %s1220, 5
      %s1223 = smul.addr %s1222, 8
      %s1224 = scalar_lea.vmem %s7, %s1223
      // Predicated region
      $region49: #{r_actor_forward.1} parent=47 // pred_check
        %p1225 = pneg %p188
      $region50: #{r_actor_forward.1} parent=47 // pred_check_branch
        %1227 = sbr.rel (%p1225) target = $region52
      $region51: #{r_actor_forward.1} parent=47 // pred_region
        %s1228 = smul.u32 3, %s18
      $region52: #{r_actor_forward.1} parent=47 // pred_fallthru
        _
    $region48: #{r_actor_forward.1} parent=5 // pred_fallthru
      _
    %p1229 = scmp.le.s32.totalorder 2, %s13
    // Predicated region
    $region53: #{r_actor_forward.1} parent=5 // pred_check
      %p1230 = pneg %p1229
    $region54: #{r_actor_forward.1} parent=5 // pred_check_branch
      %1232 = sbr.rel (%p1230) target = $region56
    $region55: #{r_actor_forward.1} parent=5 // pred_region
      %s1233 = ssub.s32 %s13, 2
      // Predicated region
      $region57: #{r_actor_forward.1} parent=55 // pred_check
        %p1234 = pneg %p194
      $region58: #{r_actor_forward.1} parent=55 // pred_check_branch
        %1236 = sbr.rel (%p1234) target = $region60
      $region59: #{r_actor_forward.1} parent=55 // pred_region
        %s1237 = smul.u32 3, %s19
        %p1238 = scmp.lt.s32.totalorder %s1237, 5
        %s1239 = scalar_select %p1238, %s1237, 5
        %s1240 = smul.addr %s1239, 8
        %s1241 = scalar_lea.vmem %s7, %s1240
      $region60: #{r_actor_forward.1} parent=55 // pred_fallthru
        _
    $region56: #{r_actor_forward.1} parent=5 // pred_fallthru
      _
  $region6: #{r_actor_forward.1} parent=0 // loop_footer
    %s17 = sadd.s32 1, %s13
  $region7: #{r_actor_forward.1} parent=0 // loop_footer_branch
    %12 = sbr.rel target = $region3
  $region8: #{r_actor_forward.1} parent=0 // loop_exit
    _

</llo_original>
